<compile_context>
chip_gen: v6e
topology: v6e:2x2x1
jax: 0.10.0
libtpu: 0.0.40
codegen_flags: <defaults>
</compile_context>

<pallas_src>
import functools
import math

import jax
import jax.numpy as jnp
import numpy as np
from jax import lax
from jax.experimental import pallas as pl
from jax.experimental.pallas import tpu as pltpu

LN_EPS = 1e-5  # PyTorch nn.LayerNorm default


def _layernorm(x, g, b):
    """LayerNorm over the last axis (biased variance, eps=1e-5), f32 math."""
    mu = jnp.mean(x, axis=-1, keepdims=True)
    xc = x - mu
    var = jnp.mean(xc * xc, axis=-1, keepdims=True)
    return xc * lax.rsqrt(var + LN_EPS) * g + b


# ------------------------------ Pallas kernel -------------------------------

def _encoder_kernel(x_ref, pos_ref,
                    ln1g_ref, ln1b_ref, wqkv_ref, bqkv_ref, wo_ref, bo_ref,
                    ln2g_ref, ln2b_ref, w1_ref, b1_ref, w2_ref, b2_ref,
                    lnfg_ref, lnfb_ref,
                    o_ref,
                    carry_ref, ctx_ref,
                    *, num_heads, batch, seq):
    """grid = (num_layers,). One full encoder block per grid step.

    The whole (batch*seq, E) token slab is resident in VMEM (carry_ref) and
    carried across the layer axis; per-layer weights are the only thing
    streamed per step.  Output is written once, after the final LayerNorm.
    """
    l = pl.program_id(0)
    n_layers = pl.num_programs(0)

    @pl.when(l == 0)
    def _init():
        # inputs + pos_embedding (pos is (1, E): same vector for every token)
        carry_ref[...] = x_ref[...] + pos_ref[...]

    cur = carry_ref[...]                               # (B*S, E) f32
    E = cur.shape[-1]
    hd = E // num_heads
    scale = 1.0 / math.sqrt(hd)

    # ---- LN1 -> fused QKV projection (bf16 MXU operands, f32 accumulate) ----
    h = _layernorm(cur, ln1g_ref[...], ln1b_ref[...]).astype(jnp.bfloat16)
    qkv = jnp.dot(h, wqkv_ref[...],
                  preferred_element_type=jnp.float32) + bqkv_ref[...]

    # Fold 1/sqrt(hd) into q (hd-wide) instead of the SxS score matrix.
    q = (qkv[:, 0 * E:1 * E] * scale).reshape(batch, seq, E).astype(jnp.bfloat16)
    k = qkv[:, 1 * E:2 * E].reshape(batch, seq, E).astype(jnp.bfloat16)
    v = qkv[:, 2 * E:3 * E].reshape(batch, seq, E).astype(jnp.bfloat16)

    # ---- multi-head self-attention: static head loop, batch-batched einsums;
    #      each head's context written straight into VMEM scratch (no concat).
    # TODO(synk): a single (batch*heads)-batched dot would need a head-major
    # relayout of q/k/v; heads kept as a small static loop instead.
    for hi in range(num_heads):
        sl = slice(hi * hd, (hi + 1) * hd)
        qh, kh, vh = q[:, :, sl], k[:, :, sl], v[:, :, sl]
        s = jnp.einsum('bqd,bkd->bqk', qh, kh,
                       preferred_element_type=jnp.float32)       # f32 scores
        s = s - jnp.max(s, axis=-1, keepdims=True)
        p = jnp.exp(s)
        p = p * pl.reciprocal(jnp.sum(p, axis=-1, keepdims=True), approx=True)
        ctx_ref[:, :, sl] = jnp.einsum('bqk,bkd->bqd', p.astype(jnp.bfloat16),
                                       vh, preferred_element_type=jnp.float32)

    ctx = ctx_ref[...].reshape(batch * seq, E).astype(jnp.bfloat16)
    attn = jnp.dot(ctx, wo_ref[...],
                   preferred_element_type=jnp.float32) + bo_ref[...]
    x1 = attn + cur                                    # residual (f32)

    # ---- LN2 -> MLP (Linear -> ReLU -> Linear) -> residual ----
    h2 = _layernorm(x1, ln2g_ref[...], ln2b_ref[...]).astype(jnp.bfloat16)
    m = jnp.maximum(
        jnp.dot(h2, w1_ref[...], preferred_element_type=jnp.float32)
        + b1_ref[...], 0.0).astype(jnp.bfloat16)
    y = jnp.dot(m, w2_ref[...], preferred_element_type=jnp.float32) + b2_ref[...]
    new = x1 + y

    carry_ref[...] = new

    @pl.when(l == n_layers - 1)
    def _final():
        o_ref[...] = _layernorm(new, lnfg_ref[...], lnfb_ref[...])


# --------------------------------- wrapper ----------------------------------

def self_attention_encoder(x, params, *, num_heads):
    """x: (B, S, E) float32 -> (B, S, E) float32."""
    x = x.astype(jnp.float32)
    B, S, E = x.shape
    layers = params["layers"]
    L = len(layers)
    M = layers[0]["w1"].shape[-1]

    def stk(name, dtype=jnp.float32):
        return jnp.stack([lp[name] for lp in layers], axis=0).astype(dtype)

    # Tokens flattened to (B*S, E): every projection is one 2-D matmul over the
    # whole batch (fills MXU rows / sublanes, amortizes the weight DMA).
    x2d = x.reshape(B * S, E)
    pos = params["pos"].reshape(1, E).astype(jnp.float32)

    ln1g = stk("ln1_g").reshape(L, 1, E)
    ln1b = stk("ln1_b").reshape(L, 1, E)
    wqkv = stk("wqkv", jnp.bfloat16)                # (L, E, 3E) bf16 weights
    bqkv = stk("bqkv").reshape(L, 1, 3 * E)
    wo = stk("wo", jnp.bfloat16)                    # (L, E, E)
    bo = stk("bo").reshape(L, 1, E)
    ln2g = stk("ln2_g").reshape(L, 1, E)
    ln2b = stk("ln2_b").reshape(L, 1, E)
    w1 = stk("w1", jnp.bfloat16)                    # (L, E, M)
    b1 = stk("b1").reshape(L, 1, M)
    w2 = stk("w2", jnp.bfloat16)                    # (L, M, E)
    b2 = stk("b2").reshape(L, 1, E)
    lnfg = params["lnf_g"].reshape(1, E).astype(jnp.float32)
    lnfb = params["lnf_b"].reshape(1, E).astype(jnp.float32)

    def lay(*shape):   # per-layer stacked param: leading layer dim squeezed
        return pl.BlockSpec((pl.Squeezed(),) + shape, lambda l: (l, 0, 0))

    def cst(*shape):   # shared param / activation: same block every step
        return pl.BlockSpec(shape, lambda l: (0, 0))

    in_specs = [
        cst(B * S, E),                   # x (flattened tokens)
        cst(1, E),                       # pos embedding
        lay(1, E), lay(1, E),            # ln1 gamma / beta
        lay(E, 3 * E), lay(1, 3 * E),    # wqkv / bqkv
        lay(E, E), lay(1, E),            # wo / bo
        lay(1, E), lay(1, E),            # ln2 gamma / beta
        lay(E, M), lay(1, M),            # w1 / b1
        lay(M, E), lay(1, E),            # w2 / b2
        cst(1, E), cst(1, E),            # final LN gamma / beta
    ]

    out2d = pl.pallas_call(
        functools.partial(_encoder_kernel, num_heads=num_heads, batch=B, seq=S),
        out_shape=jax.ShapeDtypeStruct((B * S, E), jnp.float32),
        grid=(L,),
        in_specs=in_specs,
        out_specs=pl.BlockSpec((B * S, E), lambda l: (0, 0)),
        scratch_shapes=[
            pltpu.VMEM((B * S, E), jnp.float32),    # residual-stream carry
            pltpu.VMEM((B, S, E), jnp.float32),     # per-layer attention ctx
        ],
        compiler_params=pltpu.CompilerParams(
            # single layer axis is a sequential carry; for large B add a
            # leading "parallel" batch-block axis (Bt >= several) for megacore.
            dimension_semantics=("arbitrary",),
            # above the 16/32 MiB scoped defaults, below v7x's 64 MiB physical;
            # size to ~2x the per-layer weight+activation set at real shapes.
            vmem_limit_bytes=48 * 1024 * 1024,
        ),
    )(x2d, pos, ln1g, ln1b, wqkv, bqkv, wo, bo,
      ln2g, ln2b, w1, b1, w2, b2, lnfg, lnfb)

    return out2d.reshape(B, S, E)


# ---------------------------- params / reference ----------------------------

def init_params(key, num_layers, input_dim, mlp_dim):
    E, Mh = input_dim, mlp_dim
    keys = iter(jax.random.split(key, 12 * num_layers + 3))
    nrm = lambda shape, std: std * jax.random.normal(next(keys), shape, jnp.float32)

    params = {"pos": nrm((1, E), 0.02), "layers": []}
    for _ in range(num_layers):
        params["layers"].append(dict(
            ln1_g=1.0 + nrm((E,), 0.02),
            ln1_b=nrm((E,), 0.02),
            wqkv=nrm((E, 3 * E), 1.0 / np.sqrt(E)),   # x @ wqkv (== in_proj_weight.T)
            bqkv=nrm((3 * E,), 0.02),
            wo=nrm((E, E), 1.0 / np.sqrt(E)),          # out_proj.weight.T
            bo=nrm((E,), 0.02),
            ln2_g=1.0 + nrm((E,), 0.02),
            ln2_b=nrm((E,), 0.02),
            w1=nrm((E, Mh), 1.0 / np.sqrt(E)),
            b1=nrm((Mh,), 0.02),
            w2=nrm((Mh, E), 1.0 / np.sqrt(Mh)),
            b2=nrm((E,), 0.02),
        ))
    params["lnf_g"] = 1.0 + nrm((E,), 0.02)
    params["lnf_b"] = nrm((E,), 0.02)
    return params


def encoder_reference(x, params, *, num_heads):
    """Pure-JAX f32 reference (eval mode, dropout=0)."""
    x = x.astype(jnp.float32) + params["pos"]
    B, S, E = x.shape
    hd = E // num_heads
    for lp in params["layers"]:
        h = _layernorm(x, lp["ln1_g"], lp["ln1_b"])
        qkv = h @ lp["wqkv"] + lp["bqkv"]
        q = qkv[..., 0 * E:1 * E].reshape(B, S, num_heads, hd)
        k = qkv[..., 1 * E:2 * E].reshape(B, S, num_heads, hd)
        v = qkv[..., 2 * E:3 * E].reshape(B, S, num_heads, hd)
        s = jnp.einsum("bqhd,bkhd->bhqk", q, k) / np.sqrt(hd)
        p = jax.nn.softmax(s, axis=-1)
        ctx = jnp.einsum("bhqk,bkhd->bqhd", p, v).reshape(B, S, E)
        attn = ctx @ lp["wo"] + lp["bo"]
        x = attn + x
        h2 = _layernorm(x, lp["ln2_g"], lp["ln2_b"])
        y = jnp.maximum(h2 @ lp["w1"] + lp["b1"], 0.0) @ lp["w2"] + lp["b2"]
        x = x + y
    return _layernorm(x, params["lnf_g"], params["lnf_b"])


if __name__ == "__main__":
    NUM_LAYERS, NUM_HEADS, INPUT_DIM, MLP_DIM = 2, 4, 32, 64
    B, S = 2, 8

    key = jax.random.PRNGKey(0)
    kx, kp = jax.random.split(key)
    x = jax.random.normal(kx, (B, S, INPUT_DIM), jnp.float32)
    params = init_params(kp, NUM_LAYERS, INPUT_DIM, MLP_DIM)

    out = self_attention_encoder(x, params, num_heads=NUM_HEADS)
    out = jax.block_until_ready(out)

    ref = encoder_reference(x, params, num_heads=NUM_HEADS)
    assert out.shape == ref.shape, (out.shape, ref.shape)
    # bf16 MXU operands (f32 accumulation) -> slightly looser tolerance than f32.
    np.testing.assert_allclose(np.asarray(out), np.asarray(ref),
                               rtol=3e-2, atol=3e-2)

    print("KERNEL_OK")
</pallas_src>

<mosaic_0001>
module attributes {stable_mosaic.version = 11 : i64} {
  func.func @_encoder_kernel(%arg0: i32, %arg1: memref<16x32xf32, #tpu.memory_space<vmem>>, %arg2: memref<1x32xf32, #tpu.memory_space<vmem>>, %arg3: memref<1x1x32xf32, #tpu.memory_space<vmem>>, %arg4: memref<1x1x32xf32, #tpu.memory_space<vmem>>, %arg5: memref<1x32x96xbf16, #tpu.memory_space<vmem>>, %arg6: memref<1x1x96xf32, #tpu.memory_space<vmem>>, %arg7: memref<1x32x32xbf16, #tpu.memory_space<vmem>>, %arg8: memref<1x1x32xf32, #tpu.memory_space<vmem>>, %arg9: memref<1x1x32xf32, #tpu.memory_space<vmem>>, %arg10: memref<1x1x32xf32, #tpu.memory_space<vmem>>, %arg11: memref<1x32x64xbf16, #tpu.memory_space<vmem>>, %arg12: memref<1x1x64xf32, #tpu.memory_space<vmem>>, %arg13: memref<1x64x32xbf16, #tpu.memory_space<vmem>>, %arg14: memref<1x1x32xf32, #tpu.memory_space<vmem>>, %arg15: memref<1x32xf32, #tpu.memory_space<vmem>>, %arg16: memref<1x32xf32, #tpu.memory_space<vmem>>, %arg17: memref<16x32xf32, #tpu.memory_space<vmem>>, %arg18: memref<16x32xf32, #tpu.memory_space<vmem>>, %arg19: memref<2x8x32xf32, #tpu.memory_space<vmem>>) attributes {dimension_semantics = [#tpu.dimension_semantics<arbitrary>], iteration_bounds = array<i64: 2>, scalar_prefetch = 0 : i64, scratch_operands = 2 : i64, tpu.core_type = #tpu.core_type<tc>, window_params = [{pipeline_mode = #tpu.pipeline_mode<synchronous>, transform_indices = @transform_0, window_bounds = array<i64: 16, 32>}, {pipeline_mode = #tpu.pipeline_mode<synchronous>, transform_indices = @transform_1, window_bounds = array<i64: 1, 32>}, {transform_indices = @transform_2, window_bounds = array<i64: 1, 1, 32>}, {transform_indices = @transform_3, window_bounds = array<i64: 1, 1, 32>}, {transform_indices = @transform_4, window_bounds = array<i64: 1, 32, 96>}, {transform_indices = @transform_5, window_bounds = array<i64: 1, 1, 96>}, {transform_indices = @transform_6, window_bounds = array<i64: 1, 32, 32>}, {transform_indices = @transform_7, window_bounds = array<i64: 1, 1, 32>}, {transform_indices = @transform_8, window_bounds = array<i64: 1, 1, 32>}, {transform_indices = @transform_9, window_bounds = array<i64: 1, 1, 32>}, {transform_indices = @transform_10, window_bounds = array<i64: 1, 32, 64>}, {transform_indices = @transform_11, window_bounds = array<i64: 1, 1, 64>}, {transform_indices = @transform_12, window_bounds = array<i64: 1, 64, 32>}, {transform_indices = @transform_13, window_bounds = array<i64: 1, 1, 32>}, {pipeline_mode = #tpu.pipeline_mode<synchronous>, transform_indices = @transform_14, window_bounds = array<i64: 1, 32>}, {pipeline_mode = #tpu.pipeline_mode<synchronous>, transform_indices = @transform_15, window_bounds = array<i64: 1, 32>}, {pipeline_mode = #tpu.pipeline_mode<synchronous>, transform_indices = @transform_16, window_bounds = array<i64: 16, 32>}]} {
    %c0_i32 = arith.constant 0 : i32
    %0 = arith.cmpi eq, %arg0, %c0_i32 : i32
    %1 = arith.extui %0 : i1 to i32
    %c0_i32_0 = arith.constant 0 : i32
    %2 = arith.cmpi ne, %1, %c0_i32_0 : i32
    scf.if %2 {
      %c0_84 = arith.constant 0 : index
      %c0_85 = arith.constant 0 : index
      %173 = vector.load %arg1[%c0_84, %c0_85] : memref<16x32xf32, #tpu.memory_space<vmem>>, vector<16x32xf32>
      %c0_86 = arith.constant 0 : index
      %c0_87 = arith.constant 0 : index
      %174 = vector.load %arg2[%c0_86, %c0_87] : memref<1x32xf32, #tpu.memory_space<vmem>>, vector<1x32xf32>
      %175 = vector.broadcast %174 : vector<1x32xf32> to vector<16x32xf32>
      %176 = arith.addf %173, %175 : vector<16x32xf32>
      %c0_88 = arith.constant 0 : index
      %c0_89 = arith.constant 0 : index
      %177 = vector.load %arg18[%c0_88, %c0_89] : memref<16x32xf32, #tpu.memory_space<vmem>>, vector<16x32xf32>
      tpu.vector_store %arg18[%c0_88, %c0_89], %176 {strides = array<i32>} : memref<16x32xf32, #tpu.memory_space<vmem>>, vector<16x32xf32>,
    } else {
    }
    %c0 = arith.constant 0 : index
    %c0_1 = arith.constant 0 : index
    %3 = vector.load %arg18[%c0, %c0_1] : memref<16x32xf32, #tpu.memory_space<vmem>>, vector<16x32xf32>
    %c0_2 = arith.constant 0 : index
    %c0_3 = arith.constant 0 : index
    %c0_4 = arith.constant 0 : index
    %4 = vector.load %arg3[%c0_2, %c0_3, %c0_4] : memref<1x1x32xf32, #tpu.memory_space<vmem>>, vector<1x1x32xf32>
    %5 = vector.shape_cast %4 : vector<1x1x32xf32> to vector<1x32xf32>
    %c0_5 = arith.constant 0 : index
    %c0_6 = arith.constant 0 : index
    %c0_7 = arith.constant 0 : index
    %6 = vector.load %arg4[%c0_5, %c0_6, %c0_7] : memref<1x1x32xf32, #tpu.memory_space<vmem>>, vector<1x1x32xf32>
    %7 = vector.shape_cast %6 : vector<1x1x32xf32> to vector<1x32xf32>
    %cst = arith.constant dense<0.000000e+00> : vector<16xf32>
    %8 = vector.multi_reduction <add>, %3, %cst [1] : vector<16x32xf32> to vector<16xf32>
    %9 = vector.shape_cast %8 : vector<16xf32> to vector<16x1xf32>
    %cst_8 = arith.constant 3.200000e+01 : f32
    %10 = vector.broadcast %cst_8 : f32 to vector<16x1xf32>
    %11 = arith.divf %9, %10 : vector<16x1xf32>
    %12 = vector.broadcast %11 : vector<16x1xf32> to vector<16x32xf32>
    %13 = arith.subf %3, %12 : vector<16x32xf32>
    %14 = arith.mulf %13, %13 : vector<16x32xf32>
    %cst_9 = arith.constant dense<0.000000e+00> : vector<16xf32>
    %15 = vector.multi_reduction <add>, %14, %cst_9 [1] : vector<16x32xf32> to vector<16xf32>
    %16 = vector.shape_cast %15 : vector<16xf32> to vector<16x1xf32>
    %cst_10 = arith.constant 3.200000e+01 : f32
    %17 = vector.broadcast %cst_10 : f32 to vector<16x1xf32>
    %18 = arith.divf %16, %17 : vector<16x1xf32>
    %cst_11 = arith.constant 9.99999974E-6 : f32
    %19 = vector.broadcast %cst_11 : f32 to vector<16x1xf32>
    %20 = arith.addf %18, %19 : vector<16x1xf32>
    %21 = math.rsqrt %20 : vector<16x1xf32>
    %22 = vector.broadcast %21 : vector<16x1xf32> to vector<16x32xf32>
    %23 = arith.mulf %13, %22 : vector<16x32xf32>
    %24 = vector.broadcast %5 : vector<1x32xf32> to vector<16x32xf32>
    %25 = arith.mulf %23, %24 : vector<16x32xf32>
    %26 = vector.broadcast %7 : vector<1x32xf32> to vector<16x32xf32>
    %27 = arith.addf %25, %26 : vector<16x32xf32>
    %28 = arith.truncf %27 : vector<16x32xf32> to vector<16x32xbf16>
    %c0_12 = arith.constant 0 : index
    %c0_13 = arith.constant 0 : index
    %c0_14 = arith.constant 0 : index
    %29 = vector.load %arg5[%c0_12, %c0_13, %c0_14] : memref<1x32x96xbf16, #tpu.memory_space<vmem>>, vector<1x32x96xbf16>
    %30 = vector.shape_cast %29 : vector<1x32x96xbf16> to vector<32x96xbf16>
    %cst_15 = arith.constant dense<0.000000e+00> : vector<16x96xf32>
    %31 = tpu.matmul %28, %30, %cst_15 {dimension_numbers = #tpu.dot_dimension_numbers<[1], [0], [0], [1], [0, 0, 1, 1], [], []>} : vector<16x32xbf16>, vector<32x96xbf16>, vector<16x96xf32> -> vector<16x96xf32>
    %c0_16 = arith.constant 0 : index
    %c0_17 = arith.constant 0 : index
    %c0_18 = arith.constant 0 : index
    %32 = vector.load %arg6[%c0_16, %c0_17, %c0_18] : memref<1x1x96xf32, #tpu.memory_space<vmem>>, vector<1x1x96xf32>
    %33 = vector.shape_cast %32 : vector<1x1x96xf32> to vector<1x96xf32>
    %34 = vector.broadcast %33 : vector<1x96xf32> to vector<16x96xf32>
    %35 = arith.addf %31, %34 : vector<16x96xf32>
    %36 = vector.extract_strided_slice %35 {offsets = [0, 0], sizes = [16, 32], strides = [1, 1]} : vector<16x96xf32> to vector<16x32xf32>
    %cst_19 = arith.constant 0.353553385 : f32
    %37 = vector.broadcast %cst_19 : f32 to vector<16x32xf32>
    %38 = arith.mulf %36, %37 : vector<16x32xf32>
    %39 = vector.shape_cast %38 : vector<16x32xf32> to vector<2x8x32xf32>
    %40 = arith.truncf %39 : vector<2x8x32xf32> to vector<2x8x32xbf16>
    %41 = vector.extract_strided_slice %35 {offsets = [0, 32], sizes = [16, 32], strides = [1, 1]} : vector<16x96xf32> to vector<16x32xf32>
    %42 = vector.shape_cast %41 : vector<16x32xf32> to vector<2x8x32xf32>
    %43 = arith.truncf %42 : vector<2x8x32xf32> to vector<2x8x32xbf16>
    %44 = vector.extract_strided_slice %35 {offsets = [0, 64], sizes = [16, 32], strides = [1, 1]} : vector<16x96xf32> to vector<16x32xf32>
    %45 = vector.shape_cast %44 : vector<16x32xf32> to vector<2x8x32xf32>
    %46 = arith.truncf %45 : vector<2x8x32xf32> to vector<2x8x32xbf16>
    %47 = vector.extract_strided_slice %40 {offsets = [0, 0, 0], sizes = [2, 8, 8], strides = [1, 1, 1]} : vector<2x8x32xbf16> to vector<2x8x8xbf16>
    %48 = vector.extract_strided_slice %43 {offsets = [0, 0, 0], sizes = [2, 8, 8], strides = [1, 1, 1]} : vector<2x8x32xbf16> to vector<2x8x8xbf16>
    %49 = vector.extract_strided_slice %46 {offsets = [0, 0, 0], sizes = [2, 8, 8], strides = [1, 1, 1]} : vector<2x8x32xbf16> to vector<2x8x8xbf16>
    "tpu.trace_start"() <{level = 10 : i32, message = "bqd,bkd->bqk"}> : () -> ()
    %cst_20 = arith.constant dense<0.000000e+00> : vector<2x8x8xf32>
    %50 = tpu.matmul %47, %48, %cst_20 {dimension_numbers = #tpu.dot_dimension_numbers<[2], [2], [1], [1], [0, 0, 0, 1, 1, 1], [0], [0]>} : vector<2x8x8xbf16>, vector<2x8x8xbf16>, vector<2x8x8xf32> -> vector<2x8x8xf32>
    "tpu.trace_stop"() : () -> ()
    %cst_21 = arith.constant dense<0xFF800000> : vector<2x8xf32>
    %51 = vector.multi_reduction <maximumf>, %50, %cst_21 [2] : vector<2x8x8xf32> to vector<2x8xf32>
    %52 = vector.shape_cast %51 : vector<2x8xf32> to vector<2x8x1xf32>
    %53 = vector.broadcast %52 : vector<2x8x1xf32> to vector<2x8x8xf32>
    %54 = arith.subf %50, %53 : vector<2x8x8xf32>
    %55 = math.exp %54 : vector<2x8x8xf32>
    %cst_22 = arith.constant dense<0.000000e+00> : vector<2x8xf32>
    %56 = vector.multi_reduction <add>, %55, %cst_22 [2] : vector<2x8x8xf32> to vector<2x8xf32>
    %57 = vector.shape_cast %56 : vector<2x8xf32> to vector<2x8x1xf32>
    %58 = tpu.reciprocal %57 {approx = true} : vector<2x8x1xf32> -> vector<2x8x1xf32>
    %59 = vector.broadcast %58 : vector<2x8x1xf32> to vector<2x8x8xf32>
    %60 = arith.mulf %55, %59 : vector<2x8x8xf32>
    %61 = arith.truncf %60 : vector<2x8x8xf32> to vector<2x8x8xbf16>
    "tpu.trace_start"() <{level = 10 : i32, message = "bqk,bkd->bqd"}> : () -> ()
    %cst_23 = arith.constant dense<0.000000e+00> : vector<2x8x8xf32>
    %62 = tpu.matmul %61, %49, %cst_23 {dimension_numbers = #tpu.dot_dimension_numbers<[2], [1], [1], [2], [0, 0, 0, 1, 1, 2], [0], [0]>} : vector<2x8x8xbf16>, vector<2x8x8xbf16>, vector<2x8x8xf32> -> vector<2x8x8xf32>
    "tpu.trace_stop"() : () -> ()
    %c0_24 = arith.constant 0 : index
    %c0_25 = arith.constant 0 : index
    %c0_26 = arith.constant 0 : index
    %63 = vector.load %arg19[%c0_24, %c0_25, %c0_26] : memref<2x8x32xf32, #tpu.memory_space<vmem>>, vector<2x8x8xf32>
    tpu.vector_store %arg19[%c0_24, %c0_25, %c0_26], %62 {strides = array<i32>} : memref<2x8x32xf32, #tpu.memory_space<vmem>>, vector<2x8x8xf32>,
    %64 = vector.extract_strided_slice %40 {offsets = [0, 0, 8], sizes = [2, 8, 8], strides = [1, 1, 1]} : vector<2x8x32xbf16> to vector<2x8x8xbf16>
    %65 = vector.extract_strided_slice %43 {offsets = [0, 0, 8], sizes = [2, 8, 8], strides = [1, 1, 1]} : vector<2x8x32xbf16> to vector<2x8x8xbf16>
    %66 = vector.extract_strided_slice %46 {offsets = [0, 0, 8], sizes = [2, 8, 8], strides = [1, 1, 1]} : vector<2x8x32xbf16> to vector<2x8x8xbf16>
    "tpu.trace_start"() <{level = 10 : i32, message = "bqd,bkd->bqk"}> : () -> ()
    %cst_27 = arith.constant dense<0.000000e+00> : vector<2x8x8xf32>
    %67 = tpu.matmul %64, %65, %cst_27 {dimension_numbers = #tpu.dot_dimension_numbers<[2], [2], [1], [1], [0, 0, 0, 1, 1, 1], [0], [0]>} : vector<2x8x8xbf16>, vector<2x8x8xbf16>, vector<2x8x8xf32> -> vector<2x8x8xf32>
    "tpu.trace_stop"() : () -> ()
    %cst_28 = arith.constant dense<0xFF800000> : vector<2x8xf32>
    %68 = vector.multi_reduction <maximumf>, %67, %cst_28 [2] : vector<2x8x8xf32> to vector<2x8xf32>
    %69 = vector.shape_cast %68 : vector<2x8xf32> to vector<2x8x1xf32>
    %70 = vector.broadcast %69 : vector<2x8x1xf32> to vector<2x8x8xf32>
    %71 = arith.subf %67, %70 : vector<2x8x8xf32>
    %72 = math.exp %71 : vector<2x8x8xf32>
    %cst_29 = arith.constant dense<0.000000e+00> : vector<2x8xf32>
    %73 = vector.multi_reduction <add>, %72, %cst_29 [2] : vector<2x8x8xf32> to vector<2x8xf32>
    %74 = vector.shape_cast %73 : vector<2x8xf32> to vector<2x8x1xf32>
    %75 = tpu.reciprocal %74 {approx = true} : vector<2x8x1xf32> -> vector<2x8x1xf32>
    %76 = vector.broadcast %75 : vector<2x8x1xf32> to vector<2x8x8xf32>
    %77 = arith.mulf %72, %76 : vector<2x8x8xf32>
    %78 = arith.truncf %77 : vector<2x8x8xf32> to vector<2x8x8xbf16>
    "tpu.trace_start"() <{level = 10 : i32, message = "bqk,bkd->bqd"}> : () -> ()
    %cst_30 = arith.constant dense<0.000000e+00> : vector<2x8x8xf32>
    %79 = tpu.matmul %78, %66, %cst_30 {dimension_numbers = #tpu.dot_dimension_numbers<[2], [1], [1], [2], [0, 0, 0, 1, 1, 2], [0], [0]>} : vector<2x8x8xbf16>, vector<2x8x8xbf16>, vector<2x8x8xf32> -> vector<2x8x8xf32>
    "tpu.trace_stop"() : () -> ()
    %c0_31 = arith.constant 0 : index
    %c0_32 = arith.constant 0 : index
    %c8 = arith.constant 8 : index
    %80 = vector.load %arg19[%c0_31, %c0_32, %c8] : memref<2x8x32xf32, #tpu.memory_space<vmem>>, vector<2x8x8xf32>
    tpu.vector_store %arg19[%c0_31, %c0_32, %c8], %79 {strides = array<i32>} : memref<2x8x32xf32, #tpu.memory_space<vmem>>, vector<2x8x8xf32>,
    %81 = vector.extract_strided_slice %40 {offsets = [0, 0, 16], sizes = [2, 8, 8], strides = [1, 1, 1]} : vector<2x8x32xbf16> to vector<2x8x8xbf16>
    %82 = vector.extract_strided_slice %43 {offsets = [0, 0, 16], sizes = [2, 8, 8], strides = [1, 1, 1]} : vector<2x8x32xbf16> to vector<2x8x8xbf16>
    %83 = vector.extract_strided_slice %46 {offsets = [0, 0, 16], sizes = [2, 8, 8], strides = [1, 1, 1]} : vector<2x8x32xbf16> to vector<2x8x8xbf16>
    "tpu.trace_start"() <{level = 10 : i32, message = "bqd,bkd->bqk"}> : () -> ()
    %cst_33 = arith.constant dense<0.000000e+00> : vector<2x8x8xf32>
    %84 = tpu.matmul %81, %82, %cst_33 {dimension_numbers = #tpu.dot_dimension_numbers<[2], [2], [1], [1], [0, 0, 0, 1, 1, 1], [0], [0]>} : vector<2x8x8xbf16>, vector<2x8x8xbf16>, vector<2x8x8xf32> -> vector<2x8x8xf32>
    "tpu.trace_stop"() : () -> ()
    %cst_34 = arith.constant dense<0xFF800000> : vector<2x8xf32>
    %85 = vector.multi_reduction <maximumf>, %84, %cst_34 [2] : vector<2x8x8xf32> to vector<2x8xf32>
    %86 = vector.shape_cast %85 : vector<2x8xf32> to vector<2x8x1xf32>
    %87 = vector.broadcast %86 : vector<2x8x1xf32> to vector<2x8x8xf32>
    %88 = arith.subf %84, %87 : vector<2x8x8xf32>
    %89 = math.exp %88 : vector<2x8x8xf32>
    %cst_35 = arith.constant dense<0.000000e+00> : vector<2x8xf32>
    %90 = vector.multi_reduction <add>, %89, %cst_35 [2] : vector<2x8x8xf32> to vector<2x8xf32>
    %91 = vector.shape_cast %90 : vector<2x8xf32> to vector<2x8x1xf32>
    %92 = tpu.reciprocal %91 {approx = true} : vector<2x8x1xf32> -> vector<2x8x1xf32>
    %93 = vector.broadcast %92 : vector<2x8x1xf32> to vector<2x8x8xf32>
    %94 = arith.mulf %89, %93 : vector<2x8x8xf32>
    %95 = arith.truncf %94 : vector<2x8x8xf32> to vector<2x8x8xbf16>
    "tpu.trace_start"() <{level = 10 : i32, message = "bqk,bkd->bqd"}> : () -> ()
    %cst_36 = arith.constant dense<0.000000e+00> : vector<2x8x8xf32>
    %96 = tpu.matmul %95, %83, %cst_36 {dimension_numbers = #tpu.dot_dimension_numbers<[2], [1], [1], [2], [0, 0, 0, 1, 1, 2], [0], [0]>} : vector<2x8x8xbf16>, vector<2x8x8xbf16>, vector<2x8x8xf32> -> vector<2x8x8xf32>
    "tpu.trace_stop"() : () -> ()
    %c0_37 = arith.constant 0 : index
    %c0_38 = arith.constant 0 : index
    %c16 = arith.constant 16 : index
    %97 = vector.load %arg19[%c0_37, %c0_38, %c16] : memref<2x8x32xf32, #tpu.memory_space<vmem>>, vector<2x8x8xf32>
    tpu.vector_store %arg19[%c0_37, %c0_38, %c16], %96 {strides = array<i32>} : memref<2x8x32xf32, #tpu.memory_space<vmem>>, vector<2x8x8xf32>,
    %98 = vector.extract_strided_slice %40 {offsets = [0, 0, 24], sizes = [2, 8, 8], strides = [1, 1, 1]} : vector<2x8x32xbf16> to vector<2x8x8xbf16>
    %99 = vector.extract_strided_slice %43 {offsets = [0, 0, 24], sizes = [2, 8, 8], strides = [1, 1, 1]} : vector<2x8x32xbf16> to vector<2x8x8xbf16>
    %100 = vector.extract_strided_slice %46 {offsets = [0, 0, 24], sizes = [2, 8, 8], strides = [1, 1, 1]} : vector<2x8x32xbf16> to vector<2x8x8xbf16>
    "tpu.trace_start"() <{level = 10 : i32, message = "bqd,bkd->bqk"}> : () -> ()
    %cst_39 = arith.constant dense<0.000000e+00> : vector<2x8x8xf32>
    %101 = tpu.matmul %98, %99, %cst_39 {dimension_numbers = #tpu.dot_dimension_numbers<[2], [2], [1], [1], [0, 0, 0, 1, 1, 1], [0], [0]>} : vector<2x8x8xbf16>, vector<2x8x8xbf16>, vector<2x8x8xf32> -> vector<2x8x8xf32>
    "tpu.trace_stop"() : () -> ()
    %cst_40 = arith.constant dense<0xFF800000> : vector<2x8xf32>
    %102 = vector.multi_reduction <maximumf>, %101, %cst_40 [2] : vector<2x8x8xf32> to vector<2x8xf32>
    %103 = vector.shape_cast %102 : vector<2x8xf32> to vector<2x8x1xf32>
    %104 = vector.broadcast %103 : vector<2x8x1xf32> to vector<2x8x8xf32>
    %105 = arith.subf %101, %104 : vector<2x8x8xf32>
    %106 = math.exp %105 : vector<2x8x8xf32>
    %cst_41 = arith.constant dense<0.000000e+00> : vector<2x8xf32>
    %107 = vector.multi_reduction <add>, %106, %cst_41 [2] : vector<2x8x8xf32> to vector<2x8xf32>
    %108 = vector.shape_cast %107 : vector<2x8xf32> to vector<2x8x1xf32>
    %109 = tpu.reciprocal %108 {approx = true} : vector<2x8x1xf32> -> vector<2x8x1xf32>
    %110 = vector.broadcast %109 : vector<2x8x1xf32> to vector<2x8x8xf32>
    %111 = arith.mulf %106, %110 : vector<2x8x8xf32>
    %112 = arith.truncf %111 : vector<2x8x8xf32> to vector<2x8x8xbf16>
    "tpu.trace_start"() <{level = 10 : i32, message = "bqk,bkd->bqd"}> : () -> ()
    %cst_42 = arith.constant dense<0.000000e+00> : vector<2x8x8xf32>
    %113 = tpu.matmul %112, %100, %cst_42 {dimension_numbers = #tpu.dot_dimension_numbers<[2], [1], [1], [2], [0, 0, 0, 1, 1, 2], [0], [0]>} : vector<2x8x8xbf16>, vector<2x8x8xbf16>, vector<2x8x8xf32> -> vector<2x8x8xf32>
    "tpu.trace_stop"() : () -> ()
    %c0_43 = arith.constant 0 : index
    %c0_44 = arith.constant 0 : index
    %c24 = arith.constant 24 : index
    %114 = vector.load %arg19[%c0_43, %c0_44, %c24] : memref<2x8x32xf32, #tpu.memory_space<vmem>>, vector<2x8x8xf32>
    tpu.vector_store %arg19[%c0_43, %c0_44, %c24], %113 {strides = array<i32>} : memref<2x8x32xf32, #tpu.memory_space<vmem>>, vector<2x8x8xf32>,
    %c0_45 = arith.constant 0 : index
    %c0_46 = arith.constant 0 : index
    %c0_47 = arith.constant 0 : index
    %115 = vector.load %arg19[%c0_45, %c0_46, %c0_47] : memref<2x8x32xf32, #tpu.memory_space<vmem>>, vector<2x8x32xf32>
    %116 = vector.shape_cast %115 : vector<2x8x32xf32> to vector<16x32xf32>
    %117 = arith.truncf %116 : vector<16x32xf32> to vector<16x32xbf16>
    %c0_48 = arith.constant 0 : index
    %c0_49 = arith.constant 0 : index
    %c0_50 = arith.constant 0 : index
    %118 = vector.load %arg7[%c0_48, %c0_49, %c0_50] : memref<1x32x32xbf16, #tpu.memory_space<vmem>>, vector<1x32x32xbf16>
    %119 = vector.shape_cast %118 : vector<1x32x32xbf16> to vector<32x32xbf16>
    %cst_51 = arith.constant dense<0.000000e+00> : vector<16x32xf32>
    %120 = tpu.matmul %117, %119, %cst_51 {dimension_numbers = #tpu.dot_dimension_numbers<[1], [0], [0], [1], [0, 0, 1, 1], [], []>} : vector<16x32xbf16>, vector<32x32xbf16>, vector<16x32xf32> -> vector<16x32xf32>
    %c0_52 = arith.constant 0 : index
    %c0_53 = arith.constant 0 : index
    %c0_54 = arith.constant 0 : index
    %121 = vector.load %arg8[%c0_52, %c0_53, %c0_54] : memref<1x1x32xf32, #tpu.memory_space<vmem>>, vector<1x1x32xf32>
    %122 = vector.shape_cast %121 : vector<1x1x32xf32> to vector<1x32xf32>
    %123 = vector.broadcast %122 : vector<1x32xf32> to vector<16x32xf32>
    %124 = arith.addf %120, %123 : vector<16x32xf32>
    %125 = arith.addf %124, %3 : vector<16x32xf32>
    %c0_55 = arith.constant 0 : index
    %c0_56 = arith.constant 0 : index
    %c0_57 = arith.constant 0 : index
    %126 = vector.load %arg9[%c0_55, %c0_56, %c0_57] : memref<1x1x32xf32, #tpu.memory_space<vmem>>, vector<1x1x32xf32>
    %127 = vector.shape_cast %126 : vector<1x1x32xf32> to vector<1x32xf32>
    %c0_58 = arith.constant 0 : index
    %c0_59 = arith.constant 0 : index
    %c0_60 = arith.constant 0 : index
    %128 = vector.load %arg10[%c0_58, %c0_59, %c0_60] : memref<1x1x32xf32, #tpu.memory_space<vmem>>, vector<1x1x32xf32>
    %129 = vector.shape_cast %128 : vector<1x1x32xf32> to vector<1x32xf32>
    %cst_61 = arith.constant dense<0.000000e+00> : vector<16xf32>
    %130 = vector.multi_reduction <add>, %125, %cst_61 [1] : vector<16x32xf32> to vector<16xf32>
    %131 = vector.shape_cast %130 : vector<16xf32> to vector<16x1xf32>
    %cst_62 = arith.constant 3.200000e+01 : f32
    %132 = vector.broadcast %cst_62 : f32 to vector<16x1xf32>
    %133 = arith.divf %131, %132 : vector<16x1xf32>
    %134 = vector.broadcast %133 : vector<16x1xf32> to vector<16x32xf32>
    %135 = arith.subf %125, %134 : vector<16x32xf32>
    %136 = arith.mulf %135, %135 : vector<16x32xf32>
    %cst_63 = arith.constant dense<0.000000e+00> : vector<16xf32>
    %137 = vector.multi_reduction <add>, %136, %cst_63 [1] : vector<16x32xf32> to vector<16xf32>
    %138 = vector.shape_cast %137 : vector<16xf32> to vector<16x1xf32>
    %cst_64 = arith.constant 3.200000e+01 : f32
    %139 = vector.broadcast %cst_64 : f32 to vector<16x1xf32>
    %140 = arith.divf %138, %139 : vector<16x1xf32>
    %cst_65 = arith.constant 9.99999974E-6 : f32
    %141 = vector.broadcast %cst_65 : f32 to vector<16x1xf32>
    %142 = arith.addf %140, %141 : vector<16x1xf32>
    %143 = math.rsqrt %142 : vector<16x1xf32>
    %144 = vector.broadcast %143 : vector<16x1xf32> to vector<16x32xf32>
    %145 = arith.mulf %135, %144 : vector<16x32xf32>
    %146 = vector.broadcast %127 : vector<1x32xf32> to vector<16x32xf32>
    %147 = arith.mulf %145, %146 : vector<16x32xf32>
    %148 = vector.broadcast %129 : vector<1x32xf32> to vector<16x32xf32>
    %149 = arith.addf %147, %148 : vector<16x32xf32>
    %150 = arith.truncf %149 : vector<16x32xf32> to vector<16x32xbf16>
    %c0_66 = arith.constant 0 : index
    %c0_67 = arith.constant 0 : index
    %c0_68 = arith.constant 0 : index
    %151 = vector.load %arg11[%c0_66, %c0_67, %c0_68] : memref<1x32x64xbf16, #tpu.memory_space<vmem>>, vector<1x32x64xbf16>
    %152 = vector.shape_cast %151 : vector<1x32x64xbf16> to vector<32x64xbf16>
    %cst_69 = arith.constant dense<0.000000e+00> : vector<16x64xf32>
    %153 = tpu.matmul %150, %152, %cst_69 {dimension_numbers = #tpu.dot_dimension_numbers<[1], [0], [0], [1], [0, 0, 1, 1], [], []>} : vector<16x32xbf16>, vector<32x64xbf16>, vector<16x64xf32> -> vector<16x64xf32>
    %c0_70 = arith.constant 0 : index
    %c0_71 = arith.constant 0 : index
    %c0_72 = arith.constant 0 : index
    %154 = vector.load %arg12[%c0_70, %c0_71, %c0_72] : memref<1x1x64xf32, #tpu.memory_space<vmem>>, vector<1x1x64xf32>
    %155 = vector.shape_cast %154 : vector<1x1x64xf32> to vector<1x64xf32>
    %156 = vector.broadcast %155 : vector<1x64xf32> to vector<16x64xf32>
    %157 = arith.addf %153, %156 : vector<16x64xf32>
    %cst_73 = arith.constant 0.000000e+00 : f32
    %158 = vector.broadcast %cst_73 : f32 to vector<16x64xf32>
    %159 = arith.maximumf %157, %158 : vector<16x64xf32>
    %160 = arith.truncf %159 : vector<16x64xf32> to vector<16x64xbf16>
    %c0_74 = arith.constant 0 : index
    %c0_75 = arith.constant 0 : index
    %c0_76 = arith.constant 0 : index
    %161 = vector.load %arg13[%c0_74, %c0_75, %c0_76] : memref<1x64x32xbf16, #tpu.memory_space<vmem>>, vector<1x64x32xbf16>
    %162 = vector.shape_cast %161 : vector<1x64x32xbf16> to vector<64x32xbf16>
    %cst_77 = arith.constant dense<0.000000e+00> : vector<16x32xf32>
    %163 = tpu.matmul %160, %162, %cst_77 {dimension_numbers = #tpu.dot_dimension_numbers<[1], [0], [0], [1], [0, 0, 1, 1], [], []>} : vector<16x64xbf16>, vector<64x32xbf16>, vector<16x32xf32> -> vector<16x32xf32>
    %c0_78 = arith.constant 0 : index
    %c0_79 = arith.constant 0 : index
    %c0_80 = arith.constant 0 : index
    %164 = vector.load %arg14[%c0_78, %c0_79, %c0_80] : memref<1x1x32xf32, #tpu.memory_space<vmem>>, vector<1x1x32xf32>
    %165 = vector.shape_cast %164 : vector<1x1x32xf32> to vector<1x32xf32>
    %166 = vector.broadcast %165 : vector<1x32xf32> to vector<16x32xf32>
    %167 = arith.addf %163, %166 : vector<16x32xf32>
    %168 = arith.addf %125, %167 : vector<16x32xf32>
    %c0_81 = arith.constant 0 : index
    %c0_82 = arith.constant 0 : index
    %169 = vector.load %arg18[%c0_81, %c0_82] : memref<16x32xf32, #tpu.memory_space<vmem>>, vector<16x32xf32>
    tpu.vector_store %arg18[%c0_81, %c0_82], %168 {strides = array<i32>} : memref<16x32xf32, #tpu.memory_space<vmem>>, vector<16x32xf32>,
    %c1_i32 = arith.constant 1 : i32
    %170 = arith.cmpi eq, %arg0, %c1_i32 : i32
    %171 = arith.extui %170 : i1 to i32
    %c0_i32_83 = arith.constant 0 : i32
    %172 = arith.cmpi ne, %171, %c0_i32_83 : i32
    scf.if %172 {
      %c0_84 = arith.constant 0 : index
      %c0_85 = arith.constant 0 : index
      %173 = vector.load %arg15[%c0_84, %c0_85] : memref<1x32xf32, #tpu.memory_space<vmem>>, vector<1x32xf32>
      %c0_86 = arith.constant 0 : index
      %c0_87 = arith.constant 0 : index
      %174 = vector.load %arg16[%c0_86, %c0_87] : memref<1x32xf32, #tpu.memory_space<vmem>>, vector<1x32xf32>
      %cst_88 = arith.constant dense<0.000000e+00> : vector<16xf32>
      %175 = vector.multi_reduction <add>, %168, %cst_88 [1] : vector<16x32xf32> to vector<16xf32>
      %176 = vector.shape_cast %175 : vector<16xf32> to vector<16x1xf32>
      %cst_89 = arith.constant 3.200000e+01 : f32
      %177 = vector.broadcast %cst_89 : f32 to vector<16x1xf32>
      %178 = arith.divf %176, %177 : vector<16x1xf32>
      %179 = vector.broadcast %178 : vector<16x1xf32> to vector<16x32xf32>
      %180 = arith.subf %168, %179 : vector<16x32xf32>
      %181 = arith.mulf %180, %180 : vector<16x32xf32>
      %cst_90 = arith.constant dense<0.000000e+00> : vector<16xf32>
      %182 = vector.multi_reduction <add>, %181, %cst_90 [1] : vector<16x32xf32> to vector<16xf32>
      %183 = vector.shape_cast %182 : vector<16xf32> to vector<16x1xf32>
      %cst_91 = arith.constant 3.200000e+01 : f32
      %184 = vector.broadcast %cst_91 : f32 to vector<16x1xf32>
      %185 = arith.divf %183, %184 : vector<16x1xf32>
      %cst_92 = arith.constant 9.99999974E-6 : f32
      %186 = vector.broadcast %cst_92 : f32 to vector<16x1xf32>
      %187 = arith.addf %185, %186 : vector<16x1xf32>
      %188 = math.rsqrt %187 : vector<16x1xf32>
      %189 = vector.broadcast %188 : vector<16x1xf32> to vector<16x32xf32>
      %190 = arith.mulf %180, %189 : vector<16x32xf32>
      %191 = vector.broadcast %173 : vector<1x32xf32> to vector<16x32xf32>
      %192 = arith.mulf %190, %191 : vector<16x32xf32>
      %193 = vector.broadcast %174 : vector<1x32xf32> to vector<16x32xf32>
      %194 = arith.addf %192, %193 : vector<16x32xf32>
      %c0_93 = arith.constant 0 : index
      %c0_94 = arith.constant 0 : index
      %195 = vector.load %arg17[%c0_93, %c0_94] : memref<16x32xf32, #tpu.memory_space<vmem>>, vector<16x32xf32>
      tpu.vector_store %arg17[%c0_93, %c0_94], %194 {strides = array<i32>} : memref<16x32xf32, #tpu.memory_space<vmem>>, vector<16x32xf32>,
    } else {
    }
    return
  }
  func.func @transform_0(%arg0: i32) -> (i32, i32) {
    %c0_i32 = arith.constant 0 : i32
    %c0_i32_0 = arith.constant 0 : i32
    %c0_i32_1 = arith.constant 0 : i32
    return %c0_i32, %c0_i32_0 : i32, i32
  }
  func.func @transform_1(%arg0: i32) -> (i32, i32) {
    %c0_i32 = arith.constant 0 : i32
    %c0_i32_0 = arith.constant 0 : i32
    %c0_i32_1 = arith.constant 0 : i32
    return %c0_i32, %c0_i32_0 : i32, i32
  }
  func.func @transform_2(%arg0: i32) -> (i32, i32, i32) {
    %c0_i32 = arith.constant 0 : i32
    %c0_i32_0 = arith.constant 0 : i32
    %c0_i32_1 = arith.constant 0 : i32
    return %arg0, %c0_i32, %c0_i32_0 : i32, i32, i32
  }
  func.func @transform_3(%arg0: i32) -> (i32, i32, i32) {
    %c0_i32 = arith.constant 0 : i32
    %c0_i32_0 = arith.constant 0 : i32
    %c0_i32_1 = arith.constant 0 : i32
    return %arg0, %c0_i32, %c0_i32_0 : i32, i32, i32
  }
  func.func @transform_4(%arg0: i32) -> (i32, i32, i32) {
    %c0_i32 = arith.constant 0 : i32
    %c0_i32_0 = arith.constant 0 : i32
    %c0_i32_1 = arith.constant 0 : i32
    return %arg0, %c0_i32, %c0_i32_0 : i32, i32, i32
  }
  func.func @transform_5(%arg0: i32) -> (i32, i32, i32) {
    %c0_i32 = arith.constant 0 : i32
    %c0_i32_0 = arith.constant 0 : i32
    %c0_i32_1 = arith.constant 0 : i32
    return %arg0, %c0_i32, %c0_i32_0 : i32, i32, i32
  }
  func.func @transform_6(%arg0: i32) -> (i32, i32, i32) {
    %c0_i32 = arith.constant 0 : i32
    %c0_i32_0 = arith.constant 0 : i32
    %c0_i32_1 = arith.constant 0 : i32
    return %arg0, %c0_i32, %c0_i32_0 : i32, i32, i32
  }
  func.func @transform_7(%arg0: i32) -> (i32, i32, i32) {
    %c0_i32 = arith.constant 0 : i32
    %c0_i32_0 = arith.constant 0 : i32
    %c0_i32_1 = arith.constant 0 : i32
    return %arg0, %c0_i32, %c0_i32_0 : i32, i32, i32
  }
  func.func @transform_8(%arg0: i32) -> (i32, i32, i32) {
    %c0_i32 = arith.constant 0 : i32
    %c0_i32_0 = arith.constant 0 : i32
    %c0_i32_1 = arith.constant 0 : i32
    return %arg0, %c0_i32, %c0_i32_0 : i32, i32, i32
  }
  func.func @transform_9(%arg0: i32) -> (i32, i32, i32) {
    %c0_i32 = arith.constant 0 : i32
    %c0_i32_0 = arith.constant 0 : i32
    %c0_i32_1 = arith.constant 0 : i32
    return %arg0, %c0_i32, %c0_i32_0 : i32, i32, i32
  }
  func.func @transform_10(%arg0: i32) -> (i32, i32, i32) {
    %c0_i32 = arith.constant 0 : i32
    %c0_i32_0 = arith.constant 0 : i32
    %c0_i32_1 = arith.constant 0 : i32
    return %arg0, %c0_i32, %c0_i32_0 : i32, i32, i32
  }
  func.func @transform_11(%arg0: i32) -> (i32, i32, i32) {
    %c0_i32 = arith.constant 0 : i32
    %c0_i32_0 = arith.constant 0 : i32
    %c0_i32_1 = arith.constant 0 : i32
    return %arg0, %c0_i32, %c0_i32_0 : i32, i32, i32
  }
  func.func @transform_12(%arg0: i32) -> (i32, i32, i32) {
    %c0_i32 = arith.constant 0 : i32
    %c0_i32_0 = arith.constant 0 : i32
    %c0_i32_1 = arith.constant 0 : i32
    return %arg0, %c0_i32, %c0_i32_0 : i32, i32, i32
  }
  func.func @transform_13(%arg0: i32) -> (i32, i32, i32) {
    %c0_i32 = arith.constant 0 : i32
    %c0_i32_0 = arith.constant 0 : i32
    %c0_i32_1 = arith.constant 0 : i32
    return %arg0, %c0_i32, %c0_i32_0 : i32, i32, i32
  }
  func.func @transform_14(%arg0: i32) -> (i32, i32) {
    %c0_i32 = arith.constant 0 : i32
    %c0_i32_0 = arith.constant 0 : i32
    %c0_i32_1 = arith.constant 0 : i32
    return %c0_i32, %c0_i32_0 : i32, i32
  }
  func.func @transform_15(%arg0: i32) -> (i32, i32) {
    %c0_i32 = arith.constant 0 : i32
    %c0_i32_0 = arith.constant 0 : i32
    %c0_i32_1 = arith.constant 0 : i32
    return %c0_i32, %c0_i32_0 : i32, i32
  }
  func.func @transform_16(%arg0: i32) -> (i32, i32) {
    %c0_i32 = arith.constant 0 : i32
    %c0_i32_0 = arith.constant 0 : i32
    %c0_i32_1 = arith.constant 0 : i32
    return %c0_i32, %c0_i32_0 : i32, i32
  }
}

</mosaic_0001>

<llo_original>
// kernel: tpu_custom_call.1
$region0: #{tpu_custom_call.1}
  #allocation0 [shape = 'u32[]', space=smem, size = 0x4, offset = 0x4, fixed_abs, tag = 'smem constant byte address 0x4 - core index']
  #allocation1 [shape = 'u32[144,128]{1,0:T(1,128)}', space=vmem, size = 0x12000, scoped, tag = 'internal scratch']
  #allocation2 [shape = 'f32[16,32]{1,0:T(8,128)}', space=vmem, size = 0x2000, scoped, tag = 'scratch operand']
  #allocation3 [shape = 'f32[2,8,32]{2,1,0:T(8,128)}', space=vmem, size = 0x2000, scoped, tag = 'scratch operand']
  %s0 = inlined_call_operand.hbm [shape: f32[16,32], index: 0, kind: input, shape index: {}]
  %s1 = inlined_call_operand.hbm [shape: f32[1,32], index: 1, kind: input, shape index: {}]
  %s2 = inlined_call_operand.vmem [shape: f32[2,1,32], index: 2, kind: input, shape index: {}]
  %s3 = inlined_call_operand.vmem [shape: f32[2,1,32], index: 3, kind: input, shape index: {}]
  %s4 = inlined_call_operand.vmem [shape: bf16[2,32,96], index: 4, kind: input, shape index: {}]
  %s5 = inlined_call_operand.vmem [shape: f32[2,1,96], index: 5, kind: input, shape index: {}]
  %s6 = inlined_call_operand.vmem [shape: bf16[2,32,32], index: 6, kind: input, shape index: {}]
  %s7 = inlined_call_operand.vmem [shape: f32[2,1,32], index: 7, kind: input, shape index: {}]
  %s8 = inlined_call_operand.vmem [shape: f32[2,1,32], index: 8, kind: input, shape index: {}]
  %s9 = inlined_call_operand.vmem [shape: f32[2,1,32], index: 9, kind: input, shape index: {}]
  %s10 = inlined_call_operand.vmem [shape: bf16[2,32,64], index: 10, kind: input, shape index: {}]
  %s11 = inlined_call_operand.vmem [shape: f32[2,1,64], index: 11, kind: input, shape index: {}]
  %s12 = inlined_call_operand.vmem [shape: bf16[2,64,32], index: 12, kind: input, shape index: {}]
  %s13 = inlined_call_operand.vmem [shape: f32[2,1,32], index: 13, kind: input, shape index: {}]
  %s14 = inlined_call_operand.vmem [shape: f32[1,32], index: 14, kind: input, shape index: {}]
  %s15 = inlined_call_operand.vmem [shape: f32[1,32], index: 15, kind: input, shape index: {}]
  %s16 = inlined_call_operand.hbm [shape: f32[16,32], index: 16, kind: output, shape index: {}]
  %s17 = sld [smem:[#allocation0]]
  $region113: #{tpu_custom_call.1} parent=0
    _
  %s19 = ssub.s32 1, %s17
  %s20 = scalar_select 0, %s19, %s17
  $region1: #{tpu_custom_call.1} parent=0
    #allocation4 [shape = 'u8[8192]{0}', space=vmem, size = 0x2000, scoped, tag = 'input window, operand 0, single buffered']
    #allocation5 [shape = 's32[2]{0}', space=sflag, size = 0x8, scoped, tag = 'scoped memory for tpu_custom_call.1']
    #allocation6 [shape = 's32[2]{0}', space=sflag, size = 0x8, scoped, tag = 'scoped memory for tpu_custom_call.1']
    #allocation7 [shape = 'u8[512]{0}', space=vmem, size = 0x400, scoped, tag = 'input window, operand 1, single buffered']
    #allocation8 [shape = 's32[1]{0}', space=sflag, size = 0x4, scoped, tag = 'scoped memory for tpu_custom_call.1']
    #allocation9 [shape = 'u8[8192]{0}', space=vmem, size = 0x2000, scoped, tag = 'output window, operand 0, single buffered']
    %21 = vsyncpa [#allocation5], 0
    %22 = vsyncpa [#allocation8], 0
    %23 = vsyncpa [#allocation6], 0
    loop: start=0, step=1, limit=4
    $region2: #{tpu_custom_call.1} parent=1 // loop_pre_header
      _
    $region3: #{tpu_custom_call.1} parent=1 // loop_header
      %s25 = sphi 0, %s29
      %p26 = scmp.ge.s32.totalorder %s25, 4
      %s33 = sphi 0, %s33
      %s35 = sphi 0, %s33
      %s36 = sphi 0, %s35
      %s50 = sphi 0, %s36
      %s54 = sphi 0, %s54
      %s56 = sphi 0, %s54
      %s57 = sphi 0, %s56
      %s71 = sphi 0, %s57
      %s77 = sphi 0, %s79
      %s80 = sphi 0, %s77
      %s81 = sphi 0, %s80
      %s97 = sphi 0, %s81
      %s103 = sphi 0, %s105
      %s106 = sphi 0, %s103
      %s107 = sphi 0, %s106
      %s123 = sphi 0, %s107
      %s129 = sphi 0, %s131
      %s132 = sphi 0, %s129
      %s133 = sphi 0, %s132
      %s149 = sphi 0, %s133
      %s155 = sphi 0, %s157
      %s158 = sphi 0, %s155
      %s159 = sphi 0, %s158
      %s175 = sphi 0, %s159
      %s181 = sphi 0, %s183
      %s184 = sphi 0, %s181
      %s185 = sphi 0, %s184
      %s201 = sphi 0, %s185
      %s207 = sphi 0, %s209
      %s210 = sphi 0, %s207
      %s211 = sphi 0, %s210
      %s227 = sphi 0, %s211
      %s233 = sphi 0, %s235
      %s236 = sphi 0, %s233
      %s237 = sphi 0, %s236
      %s253 = sphi 0, %s237
      %s259 = sphi 0, %s261
      %s262 = sphi 0, %s259
      %s263 = sphi 0, %s262
      %s279 = sphi 0, %s263
      %s285 = sphi 0, %s287
      %s288 = sphi 0, %s285
      %s289 = sphi 0, %s288
      %s305 = sphi 0, %s289
      %s311 = sphi 0, %s313
      %s314 = sphi 0, %s311
      %s315 = sphi 0, %s314
      %s331 = sphi 0, %s315
      %s337 = sphi 0, %s339
      %s340 = sphi 0, %s337
      %s341 = sphi 0, %s340
      %s357 = sphi 0, %s341
      %s363 = sphi 0, %s365
      %s366 = sphi 0, %s363
      %s367 = sphi 0, %s366
      %s383 = sphi 0, %s367
      %s387 = sphi 0, %s387
      %s389 = sphi 0, %s387
      %s390 = sphi 0, %s389
      %s404 = sphi 0, %s390
      %s408 = sphi 0, %s408
      %s410 = sphi 0, %s408
      %s411 = sphi 0, %s410
      %s425 = sphi 0, %s411
      %s429 = sphi 0, %s429
      %s431 = sphi 0, %s429
      %s432 = sphi 0, %s431
      %s446 = sphi 0, %s432
    $region4: #{tpu_custom_call.1} parent=1 // loop_header_branch
      %28 = sbr.rel (%p26) target = $region8
    $region5: #{tpu_custom_call.1} parent=1 // loop_body
      %s30 = ssub.s32 %s25, 1
      %s31 = ssub.s32 %s25, 2
      %s32 = sadd.s32 %s25, 1
      %s34 = sadd.s32 %s33, 1
      %p37 = scmp.eq.s32.totalorder %s25, 1
      %p38 = scmp.ne.s32.totalorder %s33, %s35
      %p39 = scmp.eq.s32.totalorder %s25, 0
      %p40 = por %p38, %p39
      %p41 = scmp.ne.s32.totalorder %s33, %s35
      %p42 = scmp.eq.s32.totalorder %s30, 1
      %p43 = por %p41, %p42
      %p44 = scmp.ne.s32.totalorder %s35, %s36
      %p45 = scmp.eq.s32.totalorder %s30, 0
      %p46 = por %p44, %p45
      %p47 = scmp.ne.s32.totalorder %s35, %s36
      %p48 = scmp.eq.s32.totalorder %s31, 1
      %p49 = por %p47, %p48
      %p51 = scmp.ne.s32.totalorder %s36, %s50
      %p52 = scmp.eq.s32.totalorder %s31, 0
      %p53 = por %p51, %p52
      %s55 = sadd.s32 %s54, 1
      %p58 = scmp.eq.s32.totalorder %s25, 1
      %p59 = scmp.ne.s32.totalorder %s54, %s56
      %p60 = scmp.eq.s32.totalorder %s25, 0
      %p61 = por %p59, %p60
      %p62 = scmp.ne.s32.totalorder %s54, %s56
      %p63 = scmp.eq.s32.totalorder %s30, 1
      %p64 = por %p62, %p63
      %p65 = scmp.ne.s32.totalorder %s56, %s57
      %p66 = scmp.eq.s32.totalorder %s30, 0
      %p67 = por %p65, %p66
      %p68 = scmp.ne.s32.totalorder %s56, %s57
      %p69 = scmp.eq.s32.totalorder %s31, 1
      %p70 = por %p68, %p69
      %p72 = scmp.ne.s32.totalorder %s57, %s71
      %p73 = scmp.eq.s32.totalorder %s31, 0
      %p74 = por %p72, %p73
      %s75 = ssub.s32 %s25, %s32
      %p76 = scmp.eq.s32.totalorder %s75, 0
      %s78 = sadd.s32 %s77, 1
      %s79 = scalar_select %p76, %s77, %s78
      %p82 = pneg %p76
      %p83 = scmp.eq.s32.totalorder %s25, 1
      %p84 = por %p82, %p83
      %p85 = scmp.ne.s32.totalorder %s77, %s80
      %p86 = scmp.eq.s32.totalorder %s25, 0
      %p87 = por %p85, %p86
      %p88 = scmp.ne.s32.totalorder %s77, %s80
      %p89 = scmp.eq.s32.totalorder %s30, 1
      %p90 = por %p88, %p89
      %p91 = scmp.ne.s32.totalorder %s80, %s81
      %p92 = scmp.eq.s32.totalorder %s30, 0
      %p93 = por %p91, %p92
      %p94 = scmp.ne.s32.totalorder %s80, %s81
      %p95 = scmp.eq.s32.totalorder %s31, 1
      %p96 = por %p94, %p95
      %p98 = scmp.ne.s32.totalorder %s81, %s97
      %p99 = scmp.eq.s32.totalorder %s31, 0
      %p100 = por %p98, %p99
      %s101 = ssub.s32 %s25, %s32
      %p102 = scmp.eq.s32.totalorder %s101, 0
      %s104 = sadd.s32 %s103, 1
      %s105 = scalar_select %p102, %s103, %s104
      %p108 = pneg %p102
      %p109 = scmp.eq.s32.totalorder %s25, 1
      %p110 = por %p108, %p109
      %p111 = scmp.ne.s32.totalorder %s103, %s106
      %p112 = scmp.eq.s32.totalorder %s25, 0
      %p113 = por %p111, %p112
      %p114 = scmp.ne.s32.totalorder %s103, %s106
      %p115 = scmp.eq.s32.totalorder %s30, 1
      %p116 = por %p114, %p115
      %p117 = scmp.ne.s32.totalorder %s106, %s107
      %p118 = scmp.eq.s32.totalorder %s30, 0
      %p119 = por %p117, %p118
      %p120 = scmp.ne.s32.totalorder %s106, %s107
      %p121 = scmp.eq.s32.totalorder %s31, 1
      %p122 = por %p120, %p121
      %p124 = scmp.ne.s32.totalorder %s107, %s123
      %p125 = scmp.eq.s32.totalorder %s31, 0
      %p126 = por %p124, %p125
      %s127 = ssub.s32 %s25, %s32
      %p128 = scmp.eq.s32.totalorder %s127, 0
      %s130 = sadd.s32 %s129, 1
      %s131 = scalar_select %p128, %s129, %s130
      %p134 = pneg %p128
      %p135 = scmp.eq.s32.totalorder %s25, 1
      %p136 = por %p134, %p135
      %p137 = scmp.ne.s32.totalorder %s129, %s132
      %p138 = scmp.eq.s32.totalorder %s25, 0
      %p139 = por %p137, %p138
      %p140 = scmp.ne.s32.totalorder %s129, %s132
      %p141 = scmp.eq.s32.totalorder %s30, 1
      %p142 = por %p140, %p141
      %p143 = scmp.ne.s32.totalorder %s132, %s133
      %p144 = scmp.eq.s32.totalorder %s30, 0
      %p145 = por %p143, %p144
      %p146 = scmp.ne.s32.totalorder %s132, %s133
      %p147 = scmp.eq.s32.totalorder %s31, 1
      %p148 = por %p146, %p147
      %p150 = scmp.ne.s32.totalorder %s133, %s149
      %p151 = scmp.eq.s32.totalorder %s31, 0
      %p152 = por %p150, %p151
      %s153 = ssub.s32 %s25, %s32
      %p154 = scmp.eq.s32.totalorder %s153, 0
      %s156 = sadd.s32 %s155, 1
      %s157 = scalar_select %p154, %s155, %s156
      %p160 = pneg %p154
      %p161 = scmp.eq.s32.totalorder %s25, 1
      %p162 = por %p160, %p161
      %p163 = scmp.ne.s32.totalorder %s155, %s158
      %p164 = scmp.eq.s32.totalorder %s25, 0
      %p165 = por %p163, %p164
      %p166 = scmp.ne.s32.totalorder %s155, %s158
      %p167 = scmp.eq.s32.totalorder %s30, 1
      %p168 = por %p166, %p167
      %p169 = scmp.ne.s32.totalorder %s158, %s159
      %p170 = scmp.eq.s32.totalorder %s30, 0
      %p171 = por %p169, %p170
      %p172 = scmp.ne.s32.totalorder %s158, %s159
      %p173 = scmp.eq.s32.totalorder %s31, 1
      %p174 = por %p172, %p173
      %p176 = scmp.ne.s32.totalorder %s159, %s175
      %p177 = scmp.eq.s32.totalorder %s31, 0
      %p178 = por %p176, %p177
      %s179 = ssub.s32 %s25, %s32
      %p180 = scmp.eq.s32.totalorder %s179, 0
      %s182 = sadd.s32 %s181, 1
      %s183 = scalar_select %p180, %s181, %s182
      %p186 = pneg %p180
      %p187 = scmp.eq.s32.totalorder %s25, 1
      %p188 = por %p186, %p187
      %p189 = scmp.ne.s32.totalorder %s181, %s184
      %p190 = scmp.eq.s32.totalorder %s25, 0
      %p191 = por %p189, %p190
      %p192 = scmp.ne.s32.totalorder %s181, %s184
      %p193 = scmp.eq.s32.totalorder %s30, 1
      %p194 = por %p192, %p193
      %p195 = scmp.ne.s32.totalorder %s184, %s185
      %p196 = scmp.eq.s32.totalorder %s30, 0
      %p197 = por %p195, %p196
      %p198 = scmp.ne.s32.totalorder %s184, %s185
      %p199 = scmp.eq.s32.totalorder %s31, 1
      %p200 = por %p198, %p199
      %p202 = scmp.ne.s32.totalorder %s185, %s201
      %p203 = scmp.eq.s32.totalorder %s31, 0
      %p204 = por %p202, %p203
      %s205 = ssub.s32 %s25, %s32
      %p206 = scmp.eq.s32.totalorder %s205, 0
      %s208 = sadd.s32 %s207, 1
      %s209 = scalar_select %p206, %s207, %s208
      %p212 = pneg %p206
      %p213 = scmp.eq.s32.totalorder %s25, 1
      %p214 = por %p212, %p213
      %p215 = scmp.ne.s32.totalorder %s207, %s210
      %p216 = scmp.eq.s32.totalorder %s25, 0
      %p217 = por %p215, %p216
      %p218 = scmp.ne.s32.totalorder %s207, %s210
      %p219 = scmp.eq.s32.totalorder %s30, 1
      %p220 = por %p218, %p219
      %p221 = scmp.ne.s32.totalorder %s210, %s211
      %p222 = scmp.eq.s32.totalorder %s30, 0
      %p223 = por %p221, %p222
      %p224 = scmp.ne.s32.totalorder %s210, %s211
      %p225 = scmp.eq.s32.totalorder %s31, 1
      %p226 = por %p224, %p225
      %p228 = scmp.ne.s32.totalorder %s211, %s227
      %p229 = scmp.eq.s32.totalorder %s31, 0
      %p230 = por %p228, %p229
      %s231 = ssub.s32 %s25, %s32
      %p232 = scmp.eq.s32.totalorder %s231, 0
      %s234 = sadd.s32 %s233, 1
      %s235 = scalar_select %p232, %s233, %s234
      %p238 = pneg %p232
      %p239 = scmp.eq.s32.totalorder %s25, 1
      %p240 = por %p238, %p239
      %p241 = scmp.ne.s32.totalorder %s233, %s236
      %p242 = scmp.eq.s32.totalorder %s25, 0
      %p243 = por %p241, %p242
      %p244 = scmp.ne.s32.totalorder %s233, %s236
      %p245 = scmp.eq.s32.totalorder %s30, 1
      %p246 = por %p244, %p245
      %p247 = scmp.ne.s32.totalorder %s236, %s237
      %p248 = scmp.eq.s32.totalorder %s30, 0
      %p249 = por %p247, %p248
      %p250 = scmp.ne.s32.totalorder %s236, %s237
      %p251 = scmp.eq.s32.totalorder %s31, 1
      %p252 = por %p250, %p251
      %p254 = scmp.ne.s32.totalorder %s237, %s253
      %p255 = scmp.eq.s32.totalorder %s31, 0
      %p256 = por %p254, %p255
      %s257 = ssub.s32 %s25, %s32
      %p258 = scmp.eq.s32.totalorder %s257, 0
      %s260 = sadd.s32 %s259, 1
      %s261 = scalar_select %p258, %s259, %s260
      %p264 = pneg %p258
      %p265 = scmp.eq.s32.totalorder %s25, 1
      %p266 = por %p264, %p265
      %p267 = scmp.ne.s32.totalorder %s259, %s262
      %p268 = scmp.eq.s32.totalorder %s25, 0
      %p269 = por %p267, %p268
      %p270 = scmp.ne.s32.totalorder %s259, %s262
      %p271 = scmp.eq.s32.totalorder %s30, 1
      %p272 = por %p270, %p271
      %p273 = scmp.ne.s32.totalorder %s262, %s263
      %p274 = scmp.eq.s32.totalorder %s30, 0
      %p275 = por %p273, %p274
      %p276 = scmp.ne.s32.totalorder %s262, %s263
      %p277 = scmp.eq.s32.totalorder %s31, 1
      %p278 = por %p276, %p277
      %p280 = scmp.ne.s32.totalorder %s263, %s279
      %p281 = scmp.eq.s32.totalorder %s31, 0
      %p282 = por %p280, %p281
      %s283 = ssub.s32 %s25, %s32
      %p284 = scmp.eq.s32.totalorder %s283, 0
      %s286 = sadd.s32 %s285, 1
      %s287 = scalar_select %p284, %s285, %s286
      %p290 = pneg %p284
      %p291 = scmp.eq.s32.totalorder %s25, 1
      %p292 = por %p290, %p291
      %p293 = scmp.ne.s32.totalorder %s285, %s288
      %p294 = scmp.eq.s32.totalorder %s25, 0
      %p295 = por %p293, %p294
      %p296 = scmp.ne.s32.totalorder %s285, %s288
      %p297 = scmp.eq.s32.totalorder %s30, 1
      %p298 = por %p296, %p297
      %p299 = scmp.ne.s32.totalorder %s288, %s289
      %p300 = scmp.eq.s32.totalorder %s30, 0
      %p301 = por %p299, %p300
      %p302 = scmp.ne.s32.totalorder %s288, %s289
      %p303 = scmp.eq.s32.totalorder %s31, 1
      %p304 = por %p302, %p303
      %p306 = scmp.ne.s32.totalorder %s289, %s305
      %p307 = scmp.eq.s32.totalorder %s31, 0
      %p308 = por %p306, %p307
      %s309 = ssub.s32 %s25, %s32
      %p310 = scmp.eq.s32.totalorder %s309, 0
      %s312 = sadd.s32 %s311, 1
      %s313 = scalar_select %p310, %s311, %s312
      %p316 = pneg %p310
      %p317 = scmp.eq.s32.totalorder %s25, 1
      %p318 = por %p316, %p317
      %p319 = scmp.ne.s32.totalorder %s311, %s314
      %p320 = scmp.eq.s32.totalorder %s25, 0
      %p321 = por %p319, %p320
      %p322 = scmp.ne.s32.totalorder %s311, %s314
      %p323 = scmp.eq.s32.totalorder %s30, 1
      %p324 = por %p322, %p323
      %p325 = scmp.ne.s32.totalorder %s314, %s315
      %p326 = scmp.eq.s32.totalorder %s30, 0
      %p327 = por %p325, %p326
      %p328 = scmp.ne.s32.totalorder %s314, %s315
      %p329 = scmp.eq.s32.totalorder %s31, 1
      %p330 = por %p328, %p329
      %p332 = scmp.ne.s32.totalorder %s315, %s331
      %p333 = scmp.eq.s32.totalorder %s31, 0
      %p334 = por %p332, %p333
      %s335 = ssub.s32 %s25, %s32
      %p336 = scmp.eq.s32.totalorder %s335, 0
      %s338 = sadd.s32 %s337, 1
      %s339 = scalar_select %p336, %s337, %s338
      %p342 = pneg %p336
      %p343 = scmp.eq.s32.totalorder %s25, 1
      %p344 = por %p342, %p343
      %p345 = scmp.ne.s32.totalorder %s337, %s340
      %p346 = scmp.eq.s32.totalorder %s25, 0
      %p347 = por %p345, %p346
      %p348 = scmp.ne.s32.totalorder %s337, %s340
      %p349 = scmp.eq.s32.totalorder %s30, 1
      %p350 = por %p348, %p349
      %p351 = scmp.ne.s32.totalorder %s340, %s341
      %p352 = scmp.eq.s32.totalorder %s30, 0
      %p353 = por %p351, %p352
      %p354 = scmp.ne.s32.totalorder %s340, %s341
      %p355 = scmp.eq.s32.totalorder %s31, 1
      %p356 = por %p354, %p355
      %p358 = scmp.ne.s32.totalorder %s341, %s357
      %p359 = scmp.eq.s32.totalorder %s31, 0
      %p360 = por %p358, %p359
      %s361 = ssub.s32 %s25, %s32
      %p362 = scmp.eq.s32.totalorder %s361, 0
      %s364 = sadd.s32 %s363, 1
      %s365 = scalar_select %p362, %s363, %s364
      %p368 = pneg %p362
      %p369 = scmp.eq.s32.totalorder %s25, 1
      %p370 = por %p368, %p369
      %p371 = scmp.ne.s32.totalorder %s363, %s366
      %p372 = scmp.eq.s32.totalorder %s25, 0
      %p373 = por %p371, %p372
      %p374 = scmp.ne.s32.totalorder %s363, %s366
      %p375 = scmp.eq.s32.totalorder %s30, 1
      %p376 = por %p374, %p375
      %p377 = scmp.ne.s32.totalorder %s366, %s367
      %p378 = scmp.eq.s32.totalorder %s30, 0
      %p379 = por %p377, %p378
      %p380 = scmp.ne.s32.totalorder %s366, %s367
      %p381 = scmp.eq.s32.totalorder %s31, 1
      %p382 = por %p380, %p381
      %p384 = scmp.ne.s32.totalorder %s367, %s383
      %p385 = scmp.eq.s32.totalorder %s31, 0
      %p386 = por %p384, %p385
      %s388 = sadd.s32 %s387, 1
      %p391 = scmp.eq.s32.totalorder %s25, 1
      %p392 = scmp.ne.s32.totalorder %s387, %s389
      %p393 = scmp.eq.s32.totalorder %s25, 0
      %p394 = por %p392, %p393
      %p395 = scmp.ne.s32.totalorder %s387, %s389
      %p396 = scmp.eq.s32.totalorder %s30, 1
      %p397 = por %p395, %p396
      %p398 = scmp.ne.s32.totalorder %s389, %s390
      %p399 = scmp.eq.s32.totalorder %s30, 0
      %p400 = por %p398, %p399
      %p401 = scmp.ne.s32.totalorder %s389, %s390
      %p402 = scmp.eq.s32.totalorder %s31, 1
      %p403 = por %p401, %p402
      %p405 = scmp.ne.s32.totalorder %s390, %s404
      %p406 = scmp.eq.s32.totalorder %s31, 0
      %p407 = por %p405, %p406
      %s409 = sadd.s32 %s408, 1
      %p412 = scmp.eq.s32.totalorder %s25, 1
      %p413 = scmp.ne.s32.totalorder %s408, %s410
      %p414 = scmp.eq.s32.totalorder %s25, 0
      %p415 = por %p413, %p414
      %p416 = scmp.ne.s32.totalorder %s408, %s410
      %p417 = scmp.eq.s32.totalorder %s30, 1
      %p418 = por %p416, %p417
      %p419 = scmp.ne.s32.totalorder %s410, %s411
      %p420 = scmp.eq.s32.totalorder %s30, 0
      %p421 = por %p419, %p420
      %p422 = scmp.ne.s32.totalorder %s410, %s411
      %p423 = scmp.eq.s32.totalorder %s31, 1
      %p424 = por %p422, %p423
      %p426 = scmp.ne.s32.totalorder %s411, %s425
      %p427 = scmp.eq.s32.totalorder %s31, 0
      %p428 = por %p426, %p427
      %s430 = sadd.s32 %s429, 1
      %p433 = scmp.eq.s32.totalorder %s25, 1
      %p434 = scmp.ne.s32.totalorder %s429, %s431
      %p435 = scmp.eq.s32.totalorder %s25, 0
      %p436 = por %p434, %p435
      %p437 = scmp.ne.s32.totalorder %s429, %s431
      %p438 = scmp.eq.s32.totalorder %s30, 1
      %p439 = por %p437, %p438
      %p440 = scmp.ne.s32.totalorder %s431, %s432
      %p441 = scmp.eq.s32.totalorder %s30, 0
      %p442 = por %p440, %p441
      %p443 = scmp.ne.s32.totalorder %s431, %s432
      %p444 = scmp.eq.s32.totalorder %s31, 1
      %p445 = por %p443, %p444
      %p447 = scmp.ne.s32.totalorder %s432, %s446
      %p448 = scmp.eq.s32.totalorder %s31, 0
      %p449 = por %p447, %p448
      %p450 = scmp.le.s32.totalorder 1, %s25
      %p451 = scmp.lt.s32.totalorder %s25, 3
      %p452 = pnand %p450, %p451
      %p453 = pneg %p452
      // Predicated region
      $region9: #{tpu_custom_call.1} parent=5 // pred_check
        _
      $region10: #{tpu_custom_call.1} parent=5 // pred_check_branch
        %455 = sbr.rel (%p452) target = $region12
      $region11: #{tpu_custom_call.1} parent=5 // pred_region
        %s456 = ssub.s32 %s25, 1
        // Predicated region
        $region13: #{tpu_custom_call.1} parent=11 // pred_check
          %p457 = pneg %p46
        $region14: #{tpu_custom_call.1} parent=11 // pred_check_branch
          %459 = sbr.rel (%p457) target = $region16
        $region15: #{tpu_custom_call.1} parent=11 // pred_region
          %s461 = ssub.s32 256, 256
          %462 = vsyncadd [#allocation5], %s461
          %s463 = sshll.u32 [#allocation4], 4
          %s464 = int_to_ptr.vmem [resolvable:$true] %s463
          %469 = dma.hbm_to_vmem [thread:$0]  %s0, 256, %s464, [#allocation5], 128, 128, 8
        $region16: #{tpu_custom_call.1} parent=11 // pred_fallthru
          _
        // Predicated region
        $region17: #{tpu_custom_call.1} parent=11 // pred_check
          %p470 = pneg %p67
        $region18: #{tpu_custom_call.1} parent=11 // pred_check_branch
          %472 = sbr.rel (%p470) target = $region20
        $region19: #{tpu_custom_call.1} parent=11 // pred_region
          %s474 = ssub.s32 16, 16
          %475 = vsyncadd [#allocation8], %s474
          %s477 = sshll.u32 [#allocation7], 4
          %s478 = int_to_ptr.vmem [resolvable:$true] %s477
          %480 = dma.hbm_to_vmem [thread:$0]  %s1, 16, %s478, [#allocation8]
        $region20: #{tpu_custom_call.1} parent=11 // pred_fallthru
          _
        // Predicated region
        $region21: #{tpu_custom_call.1} parent=11 // pred_check
          %p481 = pneg %p400
        $region22: #{tpu_custom_call.1} parent=11 // pred_check_branch
          %483 = sbr.rel (%p481) target = $region24
        $region23: #{tpu_custom_call.1} parent=11 // pred_region
          _
        $region24: #{tpu_custom_call.1} parent=11 // pred_fallthru
          _
        // Predicated region
        $region25: #{tpu_custom_call.1} parent=11 // pred_check
          %p484 = pneg %p421
        $region26: #{tpu_custom_call.1} parent=11 // pred_check_branch
          %486 = sbr.rel (%p484) target = $region28
        $region27: #{tpu_custom_call.1} parent=11 // pred_region
          _
        $region28: #{tpu_custom_call.1} parent=11 // pred_fallthru
          _
      $region12: #{tpu_custom_call.1} parent=5 // pred_fallthru
        _
      %p487 = scmp.lt.s32.totalorder %s25, 2
      // Predicated region
      $region29: #{tpu_custom_call.1} parent=5 // pred_check
        %p488 = pneg %p487
      $region30: #{tpu_custom_call.1} parent=5 // pred_check_branch
        %490 = sbr.rel (%p488) target = $region32
      $region31: #{tpu_custom_call.1} parent=5 // pred_region
        // Predicated region
        $region33: #{tpu_custom_call.1} parent=31 // pred_check
          %p491 = pneg %p87
        $region34: #{tpu_custom_call.1} parent=31 // pred_check_branch
          %493 = sbr.rel (%p491) target = $region36
        $region35: #{tpu_custom_call.1} parent=31 // pred_region
          %p494 = scmp.lt.s32.totalorder %s25, 1
          %s495 = scalar_select %p494, %s25, 1
          %s496 = scalar_lea.vmem %s2, %s495
        $region36: #{tpu_custom_call.1} parent=31 // pred_fallthru
          _
        // Predicated region
        $region37: #{tpu_custom_call.1} parent=31 // pred_check
          %p497 = pneg %p113
        $region38: #{tpu_custom_call.1} parent=31 // pred_check_branch
          %499 = sbr.rel (%p497) target = $region40
        $region39: #{tpu_custom_call.1} parent=31 // pred_region
          %p500 = scmp.lt.s32.totalorder %s25, 1
          %s501 = scalar_select %p500, %s25, 1
          %s502 = scalar_lea.vmem %s3, %s501
        $region40: #{tpu_custom_call.1} parent=31 // pred_fallthru
          _
        // Predicated region
        $region41: #{tpu_custom_call.1} parent=31 // pred_check
          %p503 = pneg %p139
        $region42: #{tpu_custom_call.1} parent=31 // pred_check_branch
          %505 = sbr.rel (%p503) target = $region44
        $region43: #{tpu_custom_call.1} parent=31 // pred_region
          %p506 = scmp.lt.s32.totalorder %s25, 1
          %s507 = scalar_select %p506, %s25, 1
          %s508 = smul.addr %s507, 4
          %s509 = smul.addr %s508, 4
          %s510 = scalar_lea.vmem %s4, %s509
        $region44: #{tpu_custom_call.1} parent=31 // pred_fallthru
          _
        // Predicated region
        $region45: #{tpu_custom_call.1} parent=31 // pred_check
          %p511 = pneg %p165
        $region46: #{tpu_custom_call.1} parent=31 // pred_check_branch
          %513 = sbr.rel (%p511) target = $region48
        $region47: #{tpu_custom_call.1} parent=31 // pred_region
          %p514 = scmp.lt.s32.totalorder %s25, 1
          %s515 = scalar_select %p514, %s25, 1
          %s516 = scalar_lea.vmem %s5, %s515
        $region48: #{tpu_custom_call.1} parent=31 // pred_fallthru
          _
        // Predicated region
        $region49: #{tpu_custom_call.1} parent=31 // pred_check
          %p517 = pneg %p191
        $region50: #{tpu_custom_call.1} parent=31 // pred_check_branch
          %519 = sbr.rel (%p517) target = $region52
        $region51: #{tpu_custom_call.1} parent=31 // pred_region
          %p520 = scmp.lt.s32.totalorder %s25, 1
          %s521 = scalar_select %p520, %s25, 1
          %s522 = smul.addr %s521, 4
          %s523 = smul.addr %s522, 4
          %s524 = scalar_lea.vmem %s6, %s523
        $region52: #{tpu_custom_call.1} parent=31 // pred_fallthru
          _
        // Predicated region
        $region53: #{tpu_custom_call.1} parent=31 // pred_check
          %p525 = pneg %p217
        $region54: #{tpu_custom_call.1} parent=31 // pred_check_branch
          %527 = sbr.rel (%p525) target = $region56
        $region55: #{tpu_custom_call.1} parent=31 // pred_region
          %p528 = scmp.lt.s32.totalorder %s25, 1
          %s529 = scalar_select %p528, %s25, 1
          %s530 = scalar_lea.vmem %s7, %s529
        $region56: #{tpu_custom_call.1} parent=31 // pred_fallthru
          _
        // Predicated region
        $region57: #{tpu_custom_call.1} parent=31 // pred_check
          %p531 = pneg %p243
        $region58: #{tpu_custom_call.1} parent=31 // pred_check_branch
          %533 = sbr.rel (%p531) target = $region60
        $region59: #{tpu_custom_call.1} parent=31 // pred_region
          %p534 = scmp.lt.s32.totalorder %s25, 1
          %s535 = scalar_select %p534, %s25, 1
          %s536 = scalar_lea.vmem %s8, %s535
        $region60: #{tpu_custom_call.1} parent=31 // pred_fallthru
          _
        // Predicated region
        $region61: #{tpu_custom_call.1} parent=31 // pred_check
          %p537 = pneg %p269
        $region62: #{tpu_custom_call.1} parent=31 // pred_check_branch
          %539 = sbr.rel (%p537) target = $region64
        $region63: #{tpu_custom_call.1} parent=31 // pred_region
          %p540 = scmp.lt.s32.totalorder %s25, 1
          %s541 = scalar_select %p540, %s25, 1
          %s542 = scalar_lea.vmem %s9, %s541
        $region64: #{tpu_custom_call.1} parent=31 // pred_fallthru
          _
        // Predicated region
        $region65: #{tpu_custom_call.1} parent=31 // pred_check
          %p543 = pneg %p295
        $region66: #{tpu_custom_call.1} parent=31 // pred_check_branch
          %545 = sbr.rel (%p543) target = $region68
        $region67: #{tpu_custom_call.1} parent=31 // pred_region
          %p546 = scmp.lt.s32.totalorder %s25, 1
          %s547 = scalar_select %p546, %s25, 1
          %s548 = smul.addr %s547, 4
          %s549 = smul.addr %s548, 4
          %s550 = scalar_lea.vmem %s10, %s549
        $region68: #{tpu_custom_call.1} parent=31 // pred_fallthru
          _
        // Predicated region
        $region69: #{tpu_custom_call.1} parent=31 // pred_check
          %p551 = pneg %p321
        $region70: #{tpu_custom_call.1} parent=31 // pred_check_branch
          %553 = sbr.rel (%p551) target = $region72
        $region71: #{tpu_custom_call.1} parent=31 // pred_region
          %p554 = scmp.lt.s32.totalorder %s25, 1
          %s555 = scalar_select %p554, %s25, 1
          %s556 = scalar_lea.vmem %s11, %s555
        $region72: #{tpu_custom_call.1} parent=31 // pred_fallthru
          _
        // Predicated region
        $region73: #{tpu_custom_call.1} parent=31 // pred_check
          %p557 = pneg %p347
        $region74: #{tpu_custom_call.1} parent=31 // pred_check_branch
          %559 = sbr.rel (%p557) target = $region76
        $region75: #{tpu_custom_call.1} parent=31 // pred_region
          %p560 = scmp.lt.s32.totalorder %s25, 1
          %s561 = scalar_select %p560, %s25, 1
          %s562 = smul.addr %s561, 8
          %s563 = smul.addr %s562, 4
          %s564 = scalar_lea.vmem %s12, %s563
        $region76: #{tpu_custom_call.1} parent=31 // pred_fallthru
          _
        // Predicated region
        $region77: #{tpu_custom_call.1} parent=31 // pred_check
          %p565 = pneg %p373
        $region78: #{tpu_custom_call.1} parent=31 // pred_check_branch
          %567 = sbr.rel (%p565) target = $region80
        $region79: #{tpu_custom_call.1} parent=31 // pred_region
          %p568 = scmp.lt.s32.totalorder %s25, 1
          %s569 = scalar_select %p568, %s25, 1
          %s570 = scalar_lea.vmem %s13, %s569
        $region80: #{tpu_custom_call.1} parent=31 // pred_fallthru
          _
      $region32: #{tpu_custom_call.1} parent=5 // pred_fallthru
        _
      %p571 = scmp.le.s32.totalorder 1, %s25
      %p572 = scmp.lt.s32.totalorder %s25, 3
      %p573 = pnand %p571, %p572
      %p574 = pneg %p573
      // Predicated region
      $region81: #{tpu_custom_call.1} parent=5 // pred_check
        _
      $region82: #{tpu_custom_call.1} parent=5 // pred_check_branch
        %576 = sbr.rel (%p573) target = $region84
      $region83: #{tpu_custom_call.1} parent=5 // pred_region
        %s577 = ssub.s32 %s25, 1
        // Predicated region
        $region85: #{tpu_custom_call.1} parent=83 // pred_check
          %p578 = pneg %p46
        $region86: #{tpu_custom_call.1} parent=83 // pred_check_branch
          %580 = sbr.rel (%p578) target = $region88
        $region87: #{tpu_custom_call.1} parent=83 // pred_region
          %581 = dma.done [#allocation5], 256
        $region88: #{tpu_custom_call.1} parent=83 // pred_fallthru
          _
        // Predicated region
        $region89: #{tpu_custom_call.1} parent=83 // pred_check
          %p582 = pneg %p67
        $region90: #{tpu_custom_call.1} parent=83 // pred_check_branch
          %584 = sbr.rel (%p582) target = $region92
        $region91: #{tpu_custom_call.1} parent=83 // pred_region
          %585 = dma.done [#allocation8], 16
        $region92: #{tpu_custom_call.1} parent=83 // pred_fallthru
          _
        %p586 = pneg %p46
        %p587 = pneg %p43
        %p588 = pneg %p67
        %p589 = pneg %p64
        %p590 = scmp.lt.s32.totalorder %s30, 1
        %s591 = scalar_select %p590, %s30, 1
        %s592 = scalar_lea.vmem %s2, %s591
        %p593 = pneg %p93
        %p594 = pneg %p90
        %p595 = scmp.lt.s32.totalorder %s30, 1
        %s596 = scalar_select %p595, %s30, 1
        %s597 = scalar_lea.vmem %s3, %s596
        %p598 = pneg %p119
        %p599 = pneg %p116
        %p600 = scmp.lt.s32.totalorder %s30, 1
        %s601 = scalar_select %p600, %s30, 1
        %s602 = smul.addr %s601, 4
        %s603 = smul.addr %s602, 4
        %s604 = scalar_lea.vmem %s4, %s603
        %p605 = pneg %p145
        %p606 = pneg %p142
        %p607 = scmp.lt.s32.totalorder %s30, 1
        %s608 = scalar_select %p607, %s30, 1
        %s609 = scalar_lea.vmem %s5, %s608
        %p610 = pneg %p171
        %p611 = pneg %p168
        %p612 = scmp.lt.s32.totalorder %s30, 1
        %s613 = scalar_select %p612, %s30, 1
        %s614 = smul.addr %s613, 4
        %s615 = smul.addr %s614, 4
        %s616 = scalar_lea.vmem %s6, %s615
        %p617 = pneg %p197
        %p618 = pneg %p194
        %p619 = scmp.lt.s32.totalorder %s30, 1
        %s620 = scalar_select %p619, %s30, 1
        %s621 = scalar_lea.vmem %s7, %s620
        %p622 = pneg %p223
        %p623 = pneg %p220
        %p624 = scmp.lt.s32.totalorder %s30, 1
        %s625 = scalar_select %p624, %s30, 1
        %s626 = scalar_lea.vmem %s8, %s625
        %p627 = pneg %p249
        %p628 = pneg %p246
        %p629 = scmp.lt.s32.totalorder %s30, 1
        %s630 = scalar_select %p629, %s30, 1
        %s631 = scalar_lea.vmem %s9, %s630
        %p632 = pneg %p275
        %p633 = pneg %p272
        %p634 = scmp.lt.s32.totalorder %s30, 1
        %s635 = scalar_select %p634, %s30, 1
        %s636 = smul.addr %s635, 4
        %s637 = smul.addr %s636, 4
        %s638 = scalar_lea.vmem %s10, %s637
        %p639 = pneg %p301
        %p640 = pneg %p298
        %p641 = scmp.lt.s32.totalorder %s30, 1
        %s642 = scalar_select %p641, %s30, 1
        %s643 = scalar_lea.vmem %s11, %s642
        %p644 = pneg %p327
        %p645 = pneg %p324
        %p646 = scmp.lt.s32.totalorder %s30, 1
        %s647 = scalar_select %p646, %s30, 1
        %s648 = smul.addr %s647, 8
        %s649 = smul.addr %s648, 4
        %s650 = scalar_lea.vmem %s12, %s649
        %p651 = pneg %p353
        %p652 = pneg %p350
        %p653 = scmp.lt.s32.totalorder %s30, 1
        %s654 = scalar_select %p653, %s30, 1
        %s655 = scalar_lea.vmem %s13, %s654
        %p656 = pneg %p379
        %p657 = pneg %p376
        %p658 = pneg %p400
        %p659 = pneg %p397
        %p660 = pneg %p421
        %p661 = pneg %p418
        %p662 = pneg %p442
        %p663 = pneg %p439
        %p664 = scmp.lt.s32.totalorder %s30, 1
        %s665 = scalar_select %p664, %s30, 1
        %s666 = scalar_lea.vmem %s2, %s665
        %p667 = scmp.lt.s32.totalorder %s30, 1
        %s668 = scalar_select %p667, %s30, 1
        %s669 = scalar_lea.vmem %s3, %s668
        %p670 = scmp.lt.s32.totalorder %s30, 1
        %s671 = scalar_select %p670, %s30, 1
        %s672 = smul.addr %s671, 4
        %s673 = smul.addr %s672, 4
        %s674 = scalar_lea.vmem %s4, %s673
        %p675 = scmp.lt.s32.totalorder %s30, 1
        %s676 = scalar_select %p675, %s30, 1
        %s677 = scalar_lea.vmem %s5, %s676
        %p678 = scmp.lt.s32.totalorder %s30, 1
        %s679 = scalar_select %p678, %s30, 1
        %s680 = smul.addr %s679, 4
        %s681 = smul.addr %s680, 4
        %s682 = scalar_lea.vmem %s6, %s681
        %p683 = scmp.lt.s32.totalorder %s30, 1
        %s684 = scalar_select %p683, %s30, 1
        %s685 = scalar_lea.vmem %s7, %s684
        %p686 = scmp.lt.s32.totalorder %s30, 1
        %s687 = scalar_select %p686, %s30, 1
        %s688 = scalar_lea.vmem %s8, %s687
        %p689 = scmp.lt.s32.totalorder %s30, 1
        %s690 = scalar_select %p689, %s30, 1
        %s691 = scalar_lea.vmem %s9, %s690
        %p692 = scmp.lt.s32.totalorder %s30, 1
        %s693 = scalar_select %p692, %s30, 1
        %s694 = smul.addr %s693, 4
        %s695 = smul.addr %s694, 4
        %s696 = scalar_lea.vmem %s10, %s695
        %p697 = scmp.lt.s32.totalorder %s30, 1
        %s698 = scalar_select %p697, %s30, 1
        %s699 = scalar_lea.vmem %s11, %s698
        %p700 = scmp.lt.s32.totalorder %s30, 1
        %s701 = scalar_select %p700, %s30, 1
        %s702 = smul.addr %s701, 8
        %s703 = smul.addr %s702, 4
        %s704 = scalar_lea.vmem %s12, %s703
        %p705 = scmp.lt.s32.totalorder %s30, 1
        %s706 = scalar_select %p705, %s30, 1
        %s707 = scalar_lea.vmem %s13, %s706
        %p709 = scmp.eq.s32.totalorder %s30, 0
        // Predicated region
        $region93: #{tpu_custom_call.1} parent=83 // pred_check
          %p710 = pneg %p709
        $region94: #{tpu_custom_call.1} parent=83 // pred_check_branch
          %712 = sbr.rel (%p710) target = $region96
        $region95: #{tpu_custom_call.1} parent=83 // pred_region
          %v713 = vld [vmem:[#allocation4] sm:$0xff]
          %v714 = vld [vmem:[#allocation4 + $0x8] sm:$0xff]
          %v715 = vld [vmem:[#allocation7] sm:$0x1]
          %v717 = vlaneseq
          %v718 = vshrl.u32 %v717, 7
          %v719 = vsub.s32 0, %v718
          %v720 = vrot.slane %v715, %v719
          %v722 = vadd.f32 %v713, %v720
          %v723 = vadd.f32 %v714, %v720
          %vm724 = vcmask 261120
          %725 = vst.msk [vmem:[#allocation2] sm:$0xff] %vm724, %v722
          %726 = vst.msk [vmem:[#allocation2 + $0x8] sm:$0xff] %vm724, %v723
        $region96: #{tpu_custom_call.1} parent=83 // pred_fallthru
          _
        %v727 = vld [vmem:[#allocation2] sm:$0xff]
        %v728 = vld [vmem:[#allocation2 + $0x8] sm:$0xff]
        %v729 = vld [vmem:[%s666] sm:$0x1]
        %v730 = vld [vmem:[%s669] sm:$0x1]
        %vm731 = vcmask 261120
        %v732 = vsel %vm731, %v727, 0.0
        %733 = vadd.xlane.f32.xlu0 %v732
        %v734 = vpop.xlane.xlu0 %733
        %v735 = vsel %vm731, %v728, 0.0
        %736 = vadd.xlane.f32.xlu0 %v735
        %v737 = vpop.xlane.xlu0 %736
        %v738 = vrcp.pop 32.0
        %v739 = vmul.f32 %v734, %v738
        %v740 = vmul.f32 %v737, %v738
        %v741 = vsub.f32 %v727, %v739
        %v742 = vsub.f32 %v728, %v740
        %v743 = vmul.f32 %v741, %v741
        %v744 = vmul.f32 %v742, %v742
        %v745 = vsel %vm731, %v743, 0.0
        %746 = vadd.xlane.f32.xlu0 %v745
        %v747 = vpop.xlane.xlu0 %746
        %v748 = vsel %vm731, %v744, 0.0
        %749 = vadd.xlane.f32.xlu0 %v748
        %v750 = vpop.xlane.xlu0 %749
        %v751 = vmul.f32 %v747, %v738
        %v752 = vmul.f32 %v750, %v738
        %v753 = vadd.f32 %v751, 1e-05
        %v754 = vadd.f32 %v752, 1e-05
        %v755 = vrsqrt.pop %v753
        %v756 = vrsqrt.pop %v754
        %v757 = vmul.f32 %v741, %v755
        %v758 = vmul.f32 %v742, %v756
        %v760 = vlaneseq
        %v761 = vshrl.u32 %v760, 7
        %v762 = vsub.s32 0, %v761
        %v763 = vrot.slane %v729, %v762
        %v765 = vmul.f32 %v757, %v763
        %v766 = vmul.f32 %v758, %v763
        %v768 = vlaneseq
        %v769 = vshrl.u32 %v768, 7
        %v770 = vsub.s32 0, %v769
        %v771 = vrot.slane %v730, %v770
        %v773 = vadd.f32 %v765, %v771
        %v774 = vadd.f32 %v766, %v771
        %v775 = vpack.c.bf16 %v774, %v773
        %v776 = vld [vmem:[%s674] sm:$0xf]
        %v777 = vld [vmem:[%s674 + $0x4] sm:$0xf]
        %v778 = vld [vmem:[%s674 + $0x8] sm:$0xf]
        %v779 = vld [vmem:[%s674 + $0xc] sm:$0xf]
        %v780 = vld [vmem:[%s677] sm:$0x1]
        %v782 = vlaneseq
        %v783 = vshrl.u32 %v782, 7
        %v784 = vsub.s32 0, %v783
        %v785 = vrot.slane %v780, %v784
        %v791 = vunpack.c.l.b16 %v776
        %v792 = vunpack.c.l.b16 %v777
        %v793 = vunpack.c.l.b16 %v778
        %v794 = vunpack.c.l.b16 %v779
        %v795 = vpack.c.b16 %v792, %v791
        %v796 = vpack.c.b16 %v794, %v793
        %v800 = vsel %vm731, %v775, 0
        %802 = vmatprep.subr.bf16.mxu0 0
        %803 = vmatpush1.bf16.msra.mxu0 0
        %804 = vmatprep.subr.bf16.mxu0 0
        %805 = vmatpush1.bf16.msra.mxu0 0
        %806 = vmatprep.subr.bf16.mxu0 0
        %807 = vmatpush1.bf16.msra.mxu0 0
        %808 = vmatprep.subr.bf16.mxu0 0
        %809 = vmatpush1.bf16.msra.mxu0 0
        %810 = vmatprep.subr.bf16.mxu0 0
        %811 = vmatpush1.bf16.msra.mxu0 0
        %812 = vmatprep.subr.bf16.mxu0 0
        %813 = vmatpush1.bf16.msra.mxu0 0
        %814 = vmatprep.subr.bf16.mxu0 0
        %815 = vmatpush1.bf16.msra.mxu0 %v796
        %816 = vmatprep.subr.bf16.mxu0 0
        %817 = vmatpush1.bf16.msra.mxu0 %v795
        %818 = vmatprep.subr.bf16.mxu0 0
        %819 = vmatpush2.bf16.msra.mxu0 0
        %820 = vmatprep.subr.bf16.mxu0 0
        %821 = vmatpush2.bf16.msra.mxu0 0
        %822 = vmatprep.subr.bf16.mxu0 0
        %823 = vmatpush2.bf16.msra.mxu0 0
        %824 = vmatprep.subr.bf16.mxu0 0
        %825 = vmatpush2.bf16.msra.mxu0 0
        %826 = vmatprep.subr.bf16.mxu0 0
        %827 = vmatpush2.bf16.msra.mxu0 0
        %828 = vmatprep.subr.bf16.mxu0 0
        %829 = vmatpush2.bf16.msra.mxu0 0
        %830 = vmatprep.subr.bf16.mxu0 0
        %831 = vmatpush2.bf16.msra.mxu0 0
        %832 = vmatprep.subr.bf16.mxu0 0
        %833 = vmatpush2.bf16.msra.mxu0 0
        %834 = vmatprep.mubr.bf16.mxu0 0
        %835 = vmatmul.mubr.bf16.gmra.mxu0 %v800
        %v836 = vpop.f32.mrf.mxu0
        %v837 = vadd.f32 %v785, %v836
        %v838 = vpop.f32.mrf.mxu0
        %v839 = vpop.f32.mrf.mxu0
        %v840 = vadd.f32 %v785, %v839
        %v841 = vpop.f32.mrf.mxu0
        %842 = vdwg.mxu0
        %v843 = vmul.f32 %v837, 0.35355338
        %v844 = vmul.f32 %v840, 0.35355338
        %v845 = vpack.c.bf16 %v843, %v843
        %v846 = vpack.c.bf16 %v844, %v844
        %v847 = vpack.c.bf16 %v837, %v837
        %v848 = vpack.c.bf16 %v840, %v840
        %850 = vrot.lane.b32.xlu0 %v847, 96
        %v851 = vpop.permute.xlu0 %850
        %vm852 = vcmask 64512
        %v854 = vsel %vm852, %v845, 0
        %v857 = vsel %vm852, %v851, 0
        %859 = vmatprep.subr.bf16.mxu0 0
        %860 = vmatpush1.bf16.xpose.msra.mxu0 0
        %861 = vmatprep.subr.bf16.mxu0 0
        %862 = vmatpush1.bf16.xpose.msra.mxu0 0
        %863 = vmatprep.subr.bf16.mxu0 0
        %864 = vmatpush1.bf16.xpose.msra.mxu0 0
        %865 = vmatprep.subr.bf16.mxu0 0
        %866 = vmatpush1.bf16.xpose.msra.mxu0 0
        %867 = vmatprep.subr.bf16.mxu0 0
        %868 = vmatpush1.bf16.xpose.msra.mxu0 0
        %869 = vmatprep.subr.bf16.mxu0 0
        %870 = vmatpush1.bf16.xpose.msra.mxu0 0
        %871 = vmatprep.subr.bf16.mxu0 0
        %872 = vmatpush1.bf16.xpose.msra.mxu0 0
        %873 = vmatprep.subr.bf16.mxu0 0
        %874 = vmatpush1.bf16.xpose.msra.mxu0 %v857
        %875 = vmatprep.subr.bf16.mxu0 0
        %876 = vmatpush2.bf16.xpose.msra.mxu0 0
        %877 = vmatprep.subr.bf16.mxu0 0
        %878 = vmatpush2.bf16.xpose.msra.mxu0 0
        %879 = vmatprep.subr.bf16.mxu0 0
        %880 = vmatpush2.bf16.xpose.msra.mxu0 0
        %881 = vmatprep.subr.bf16.mxu0 0
        %882 = vmatpush2.bf16.xpose.msra.mxu0 0
        %883 = vmatprep.subr.bf16.mxu0 0
        %884 = vmatpush2.bf16.xpose.msra.mxu0 0
        %885 = vmatprep.subr.bf16.mxu0 0
        %886 = vmatpush2.bf16.xpose.msra.mxu0 0
        %887 = vmatprep.subr.bf16.mxu0 0
        %888 = vmatpush2.bf16.xpose.msra.mxu0 0
        %889 = vmatprep.subr.bf16.mxu0 0
        %890 = vmatpush2.bf16.xpose.msra.mxu0 0
        %891 = vmatprep.mubr.bf16.mxu0 0
        %892 = vmatmul.mubr.bf16.gmra.mxu0 %v854
        %v893 = vpop.f32.mrf.mxu0
        %v894 = vadd.f32 0.0, %v893
        %v895 = vpop.f32.mrf.mxu0
        %v896 = vpop.f32.mrf.mxu0
        %v897 = vpop.f32.mrf.mxu0
        %898 = vdwg.mxu0
        %900 = vrot.lane.b32.xlu0 %v848, 96
        %v901 = vpop.permute.xlu0 %900
        %v903 = vsel %vm852, %v846, 0
        %v906 = vsel %vm852, %v901, 0
        %908 = vmatprep.subr.bf16.mxu0 0
        %909 = vmatpush1.bf16.xpose.msra.mxu0 0
        %910 = vmatprep.subr.bf16.mxu0 0
        %911 = vmatpush1.bf16.xpose.msra.mxu0 0
        %912 = vmatprep.subr.bf16.mxu0 0
        %913 = vmatpush1.bf16.xpose.msra.mxu0 0
        %914 = vmatprep.subr.bf16.mxu0 0
        %915 = vmatpush1.bf16.xpose.msra.mxu0 0
        %916 = vmatprep.subr.bf16.mxu0 0
        %917 = vmatpush1.bf16.xpose.msra.mxu0 0
        %918 = vmatprep.subr.bf16.mxu0 0
        %919 = vmatpush1.bf16.xpose.msra.mxu0 0
        %920 = vmatprep.subr.bf16.mxu0 0
        %921 = vmatpush1.bf16.xpose.msra.mxu0 0
        %922 = vmatprep.subr.bf16.mxu0 0
        %923 = vmatpush1.bf16.xpose.msra.mxu0 %v906
        %924 = vmatprep.subr.bf16.mxu0 0
        %925 = vmatpush2.bf16.xpose.msra.mxu0 0
        %926 = vmatprep.subr.bf16.mxu0 0
        %927 = vmatpush2.bf16.xpose.msra.mxu0 0
        %928 = vmatprep.subr.bf16.mxu0 0
        %929 = vmatpush2.bf16.xpose.msra.mxu0 0
        %930 = vmatprep.subr.bf16.mxu0 0
        %931 = vmatpush2.bf16.xpose.msra.mxu0 0
        %932 = vmatprep.subr.bf16.mxu0 0
        %933 = vmatpush2.bf16.xpose.msra.mxu0 0
        %934 = vmatprep.subr.bf16.mxu0 0
        %935 = vmatpush2.bf16.xpose.msra.mxu0 0
        %936 = vmatprep.subr.bf16.mxu0 0
        %937 = vmatpush2.bf16.xpose.msra.mxu0 0
        %938 = vmatprep.subr.bf16.mxu0 0
        %939 = vmatpush2.bf16.xpose.msra.mxu0 0
        %940 = vmatprep.mubr.bf16.mxu0 0
        %941 = vmatmul.mubr.bf16.gmra.mxu0 %v903
        %v942 = vpop.f32.mrf.mxu0
        %v943 = vadd.f32 0.0, %v942
        %v944 = vpop.f32.mrf.mxu0
        %v945 = vpop.f32.mrf.mxu0
        %v946 = vpop.f32.mrf.mxu0
        %947 = vdwg.mxu0
        %v948 = vsel %vm852, %v894, -inf
        %949 = vmax.xlane.f32.xlu0 %v948
        %v950 = vpop.xlane.xlu0 %949
        %v951 = vsel %vm852, %v943, -inf
        %952 = vmax.xlane.f32.xlu0 %v951
        %v953 = vpop.xlane.xlu0 %952
        %v954 = vsub.f32 %v894, %v950
        %v955 = vsub.f32 %v943, %v953
        %v956 = vmul.f32 %v954, 1.442695
        %v957 = vpow.pop %v956
        %v958 = vmul.f32 %v955, 1.442695
        %v959 = vpow.pop %v958
        %v960 = vsel %vm852, %v957, 0.0
        %961 = vadd.xlane.f32.xlu0 %v960
        %v962 = vpop.xlane.xlu0 %961
        %v963 = vsel %vm852, %v959, 0.0
        %964 = vadd.xlane.f32.xlu0 %v963
        %v965 = vpop.xlane.xlu0 %964
        %v966 = vrcp.pop %v962
        %v967 = vrcp.pop %v965
        %v968 = vmul.f32 %v957, %v966
        %v969 = vmul.f32 %v959, %v967
        %v970 = vpack.c.bf16 %v968, %v968
        %v971 = vpack.c.bf16 %v969, %v969
        %972 = vrot.lane.b32.xlu0 %v847, 64
        %v973 = vpop.permute.xlu0 %972
        %v975 = vsel %vm852, %v970, 0
        %vm977 = vcmask 1043456
        %v979 = vsel %vm977, %v973, 0
        %981 = vmatprep.subr.bf16.mxu0 0
        %982 = vmatpush1.bf16.msra.mxu0 0
        %983 = vmatprep.subr.bf16.mxu0 0
        %984 = vmatpush1.bf16.msra.mxu0 0
        %985 = vmatprep.subr.bf16.mxu0 0
        %986 = vmatpush1.bf16.msra.mxu0 0
        %987 = vmatprep.subr.bf16.mxu0 0
        %988 = vmatpush1.bf16.msra.mxu0 0
        %989 = vmatprep.subr.bf16.mxu0 0
        %990 = vmatpush1.bf16.msra.mxu0 0
        %991 = vmatprep.subr.bf16.mxu0 0
        %992 = vmatpush1.bf16.msra.mxu0 0
        %993 = vmatprep.subr.bf16.mxu0 0
        %994 = vmatpush1.bf16.msra.mxu0 0
        %995 = vmatprep.subr.bf16.mxu0 0
        %996 = vmatpush1.bf16.msra.mxu0 %v979
        %997 = vmatprep.subr.bf16.mxu0 0
        %998 = vmatpush2.bf16.msra.mxu0 0
        %999 = vmatprep.subr.bf16.mxu0 0
        %1000 = vmatpush2.bf16.msra.mxu0 0
        %1001 = vmatprep.subr.bf16.mxu0 0
        %1002 = vmatpush2.bf16.msra.mxu0 0
        %1003 = vmatprep.subr.bf16.mxu0 0
        %1004 = vmatpush2.bf16.msra.mxu0 0
        %1005 = vmatprep.subr.bf16.mxu0 0
        %1006 = vmatpush2.bf16.msra.mxu0 0
        %1007 = vmatprep.subr.bf16.mxu0 0
        %1008 = vmatpush2.bf16.msra.mxu0 0
        %1009 = vmatprep.subr.bf16.mxu0 0
        %1010 = vmatpush2.bf16.msra.mxu0 0
        %1011 = vmatprep.subr.bf16.mxu0 0
        %1012 = vmatpush2.bf16.msra.mxu0 0
        %1013 = vmatprep.mubr.bf16.mxu0 0
        %1014 = vmatmul.mubr.bf16.gmra.mxu0 %v975
        %v1015 = vpop.f32.mrf.mxu0
        %v1016 = vadd.f32 0.0, %v1015
        %v1017 = vpop.f32.mrf.mxu0
        %v1018 = vpop.f32.mrf.mxu0
        %v1019 = vpop.f32.mrf.mxu0
        %1020 = vdwg.mxu0
        %1021 = vrot.lane.b32.xlu0 %v848, 64
        %v1022 = vpop.permute.xlu0 %1021
        %v1024 = vsel %vm852, %v971, 0
        %v1027 = vsel %vm977, %v1022, 0
        %1029 = vmatprep.subr.bf16.mxu0 0
        %1030 = vmatpush1.bf16.msra.mxu0 0
        %1031 = vmatprep.subr.bf16.mxu0 0
        %1032 = vmatpush1.bf16.msra.mxu0 0
        %1033 = vmatprep.subr.bf16.mxu0 0
        %1034 = vmatpush1.bf16.msra.mxu0 0
        %1035 = vmatprep.subr.bf16.mxu0 0
        %1036 = vmatpush1.bf16.msra.mxu0 0
        %1037 = vmatprep.subr.bf16.mxu0 0
        %1038 = vmatpush1.bf16.msra.mxu0 0
        %1039 = vmatprep.subr.bf16.mxu0 0
        %1040 = vmatpush1.bf16.msra.mxu0 0
        %1041 = vmatprep.subr.bf16.mxu0 0
        %1042 = vmatpush1.bf16.msra.mxu0 0
        %1043 = vmatprep.subr.bf16.mxu0 0
        %1044 = vmatpush1.bf16.msra.mxu0 %v1027
        %1045 = vmatprep.subr.bf16.mxu0 0
        %1046 = vmatpush2.bf16.msra.mxu0 0
        %1047 = vmatprep.subr.bf16.mxu0 0
        %1048 = vmatpush2.bf16.msra.mxu0 0
        %1049 = vmatprep.subr.bf16.mxu0 0
        %1050 = vmatpush2.bf16.msra.mxu0 0
        %1051 = vmatprep.subr.bf16.mxu0 0
        %1052 = vmatpush2.bf16.msra.mxu0 0
        %1053 = vmatprep.subr.bf16.mxu0 0
        %1054 = vmatpush2.bf16.msra.mxu0 0
        %1055 = vmatprep.subr.bf16.mxu0 0
        %1056 = vmatpush2.bf16.msra.mxu0 0
        %1057 = vmatprep.subr.bf16.mxu0 0
        %1058 = vmatpush2.bf16.msra.mxu0 0
        %1059 = vmatprep.subr.bf16.mxu0 0
        %1060 = vmatpush2.bf16.msra.mxu0 0
        %1061 = vmatprep.mubr.bf16.mxu0 0
        %1062 = vmatmul.mubr.bf16.gmra.mxu0 %v1024
        %v1063 = vpop.f32.mrf.mxu0
        %v1064 = vadd.f32 0.0, %v1063
        %v1065 = vpop.f32.mrf.mxu0
        %v1066 = vpop.f32.mrf.mxu0
        %v1067 = vpop.f32.mrf.mxu0
        %1068 = vdwg.mxu0
        %1069 = vst.msk [vmem:[#allocation3] sm:$0xff] %vm852, %v1016
        %1070 = vst.msk [vmem:[#allocation3 + $0x8] sm:$0xff] %vm852, %v1064
        %1072 = vrot.lane.b32.xlu0 %v845, 120
        %v1073 = vpop.permute.xlu0 %1072
        %1074 = vrot.lane.b32.xlu0 %v847, 88
        %v1075 = vpop.permute.xlu0 %1074
        %v1077 = vsel %vm852, %v1073, 0
        %v1080 = vsel %vm852, %v1075, 0
        %1082 = vmatprep.subr.bf16.mxu0 0
        %1083 = vmatpush1.bf16.xpose.msra.mxu0 0
        %1084 = vmatprep.subr.bf16.mxu0 0
        %1085 = vmatpush1.bf16.xpose.msra.mxu0 0
        %1086 = vmatprep.subr.bf16.mxu0 0
        %1087 = vmatpush1.bf16.xpose.msra.mxu0 0
        %1088 = vmatprep.subr.bf16.mxu0 0
        %1089 = vmatpush1.bf16.xpose.msra.mxu0 0
        %1090 = vmatprep.subr.bf16.mxu0 0
        %1091 = vmatpush1.bf16.xpose.msra.mxu0 0
        %1092 = vmatprep.subr.bf16.mxu0 0
        %1093 = vmatpush1.bf16.xpose.msra.mxu0 0
        %1094 = vmatprep.subr.bf16.mxu0 0
        %1095 = vmatpush1.bf16.xpose.msra.mxu0 0
        %1096 = vmatprep.subr.bf16.mxu0 0
        %1097 = vmatpush1.bf16.xpose.msra.mxu0 %v1080
        %1098 = vmatprep.subr.bf16.mxu0 0
        %1099 = vmatpush2.bf16.xpose.msra.mxu0 0
        %1100 = vmatprep.subr.bf16.mxu0 0
        %1101 = vmatpush2.bf16.xpose.msra.mxu0 0
        %1102 = vmatprep.subr.bf16.mxu0 0
        %1103 = vmatpush2.bf16.xpose.msra.mxu0 0
        %1104 = vmatprep.subr.bf16.mxu0 0
        %1105 = vmatpush2.bf16.xpose.msra.mxu0 0
        %1106 = vmatprep.subr.bf16.mxu0 0
        %1107 = vmatpush2.bf16.xpose.msra.mxu0 0
        %1108 = vmatprep.subr.bf16.mxu0 0
        %1109 = vmatpush2.bf16.xpose.msra.mxu0 0
        %1110 = vmatprep.subr.bf16.mxu0 0
        %1111 = vmatpush2.bf16.xpose.msra.mxu0 0
        %1112 = vmatprep.subr.bf16.mxu0 0
        %1113 = vmatpush2.bf16.xpose.msra.mxu0 0
        %1114 = vmatprep.mubr.bf16.mxu0 0
        %1115 = vmatmul.mubr.bf16.gmra.mxu0 %v1077
        %v1116 = vpop.f32.mrf.mxu0
        %v1117 = vadd.f32 0.0, %v1116
        %v1118 = vpop.f32.mrf.mxu0
        %v1119 = vpop.f32.mrf.mxu0
        %v1120 = vpop.f32.mrf.mxu0
        %1121 = vdwg.mxu0
        %1123 = vrot.lane.b32.xlu0 %v846, 120
        %v1124 = vpop.permute.xlu0 %1123
        %1125 = vrot.lane.b32.xlu0 %v848, 88
        %v1126 = vpop.permute.xlu0 %1125
        %v1128 = vsel %vm852, %v1124, 0
        %v1131 = vsel %vm852, %v1126, 0
        %1133 = vmatprep.subr.bf16.mxu0 0
        %1134 = vmatpush1.bf16.xpose.msra.mxu0 0
        %1135 = vmatprep.subr.bf16.mxu0 0
        %1136 = vmatpush1.bf16.xpose.msra.mxu0 0
        %1137 = vmatprep.subr.bf16.mxu0 0
        %1138 = vmatpush1.bf16.xpose.msra.mxu0 0
        %1139 = vmatprep.subr.bf16.mxu0 0
        %1140 = vmatpush1.bf16.xpose.msra.mxu0 0
        %1141 = vmatprep.subr.bf16.mxu0 0
        %1142 = vmatpush1.bf16.xpose.msra.mxu0 0
        %1143 = vmatprep.subr.bf16.mxu0 0
        %1144 = vmatpush1.bf16.xpose.msra.mxu0 0
        %1145 = vmatprep.subr.bf16.mxu0 0
        %1146 = vmatpush1.bf16.xpose.msra.mxu0 0
        %1147 = vmatprep.subr.bf16.mxu0 0
        %1148 = vmatpush1.bf16.xpose.msra.mxu0 %v1131
        %1149 = vmatprep.subr.bf16.mxu0 0
        %1150 = vmatpush2.bf16.xpose.msra.mxu0 0
        %1151 = vmatprep.subr.bf16.mxu0 0
        %1152 = vmatpush2.bf16.xpose.msra.mxu0 0
        %1153 = vmatprep.subr.bf16.mxu0 0
        %1154 = vmatpush2.bf16.xpose.msra.mxu0 0
        %1155 = vmatprep.subr.bf16.mxu0 0
        %1156 = vmatpush2.bf16.xpose.msra.mxu0 0
        %1157 = vmatprep.subr.bf16.mxu0 0
        %1158 = vmatpush2.bf16.xpose.msra.mxu0 0
        %1159 = vmatprep.subr.bf16.mxu0 0
        %1160 = vmatpush2.bf16.xpose.msra.mxu0 0
        %1161 = vmatprep.subr.bf16.mxu0 0
        %1162 = vmatpush2.bf16.xpose.msra.mxu0 0
        %1163 = vmatprep.subr.bf16.mxu0 0
        %1164 = vmatpush2.bf16.xpose.msra.mxu0 0
        %1165 = vmatprep.mubr.bf16.mxu0 0
        %1166 = vmatmul.mubr.bf16.gmra.mxu0 %v1128
        %v1167 = vpop.f32.mrf.mxu0
        %v1168 = vadd.f32 0.0, %v1167
        %v1169 = vpop.f32.mrf.mxu0
        %v1170 = vpop.f32.mrf.mxu0
        %v1171 = vpop.f32.mrf.mxu0
        %1172 = vdwg.mxu0
        %v1173 = vsel %vm852, %v1117, -inf
        %1174 = vmax.xlane.f32.xlu0 %v1173
        %v1175 = vpop.xlane.xlu0 %1174
        %v1176 = vsel %vm852, %v1168, -inf
        %1177 = vmax.xlane.f32.xlu0 %v1176
        %v1178 = vpop.xlane.xlu0 %1177
        %v1179 = vsub.f32 %v1117, %v1175
        %v1180 = vsub.f32 %v1168, %v1178
        %v1181 = vmul.f32 %v1179, 1.442695
        %v1182 = vpow.pop %v1181
        %v1183 = vmul.f32 %v1180, 1.442695
        %v1184 = vpow.pop %v1183
        %v1185 = vsel %vm852, %v1182, 0.0
        %1186 = vadd.xlane.f32.xlu0 %v1185
        %v1187 = vpop.xlane.xlu0 %1186
        %v1188 = vsel %vm852, %v1184, 0.0
        %1189 = vadd.xlane.f32.xlu0 %v1188
        %v1190 = vpop.xlane.xlu0 %1189
        %v1191 = vrcp.pop %v1187
        %v1192 = vrcp.pop %v1190
        %v1193 = vmul.f32 %v1182, %v1191
        %v1194 = vmul.f32 %v1184, %v1192
        %v1195 = vpack.c.bf16 %v1193, %v1193
        %v1196 = vpack.c.bf16 %v1194, %v1194
        %1197 = vrot.lane.b32.xlu0 %v847, 56
        %v1198 = vpop.permute.xlu0 %1197
        %v1200 = vsel %vm852, %v1195, 0
        %v1203 = vsel %vm977, %v1198, 0
        %1205 = vmatprep.subr.bf16.mxu0 0
        %1206 = vmatpush1.bf16.msra.mxu0 0
        %1207 = vmatprep.subr.bf16.mxu0 0
        %1208 = vmatpush1.bf16.msra.mxu0 0
        %1209 = vmatprep.subr.bf16.mxu0 0
        %1210 = vmatpush1.bf16.msra.mxu0 0
        %1211 = vmatprep.subr.bf16.mxu0 0
        %1212 = vmatpush1.bf16.msra.mxu0 0
        %1213 = vmatprep.subr.bf16.mxu0 0
        %1214 = vmatpush1.bf16.msra.mxu0 0
        %1215 = vmatprep.subr.bf16.mxu0 0
        %1216 = vmatpush1.bf16.msra.mxu0 0
        %1217 = vmatprep.subr.bf16.mxu0 0
        %1218 = vmatpush1.bf16.msra.mxu0 0
        %1219 = vmatprep.subr.bf16.mxu0 0
        %1220 = vmatpush1.bf16.msra.mxu0 %v1203
        %1221 = vmatprep.subr.bf16.mxu0 0
        %1222 = vmatpush2.bf16.msra.mxu0 0
        %1223 = vmatprep.subr.bf16.mxu0 0
        %1224 = vmatpush2.bf16.msra.mxu0 0
        %1225 = vmatprep.subr.bf16.mxu0 0
        %1226 = vmatpush2.bf16.msra.mxu0 0
        %1227 = vmatprep.subr.bf16.mxu0 0
        %1228 = vmatpush2.bf16.msra.mxu0 0
        %1229 = vmatprep.subr.bf16.mxu0 0
        %1230 = vmatpush2.bf16.msra.mxu0 0
        %1231 = vmatprep.subr.bf16.mxu0 0
        %1232 = vmatpush2.bf16.msra.mxu0 0
        %1233 = vmatprep.subr.bf16.mxu0 0
        %1234 = vmatpush2.bf16.msra.mxu0 0
        %1235 = vmatprep.subr.bf16.mxu0 0
        %1236 = vmatpush2.bf16.msra.mxu0 0
        %1237 = vmatprep.mubr.bf16.mxu0 0
        %1238 = vmatmul.mubr.bf16.gmra.mxu0 %v1200
        %v1239 = vpop.f32.mrf.mxu0
        %v1240 = vadd.f32 0.0, %v1239
        %v1241 = vpop.f32.mrf.mxu0
        %v1242 = vpop.f32.mrf.mxu0
        %v1243 = vpop.f32.mrf.mxu0
        %1244 = vdwg.mxu0
        %1245 = vrot.lane.b32.xlu0 %v848, 56
        %v1246 = vpop.permute.xlu0 %1245
        %v1248 = vsel %vm852, %v1196, 0
        %v1251 = vsel %vm977, %v1246, 0
        %1253 = vmatprep.subr.bf16.mxu0 0
        %1254 = vmatpush1.bf16.msra.mxu0 0
        %1255 = vmatprep.subr.bf16.mxu0 0
        %1256 = vmatpush1.bf16.msra.mxu0 0
        %1257 = vmatprep.subr.bf16.mxu0 0
        %1258 = vmatpush1.bf16.msra.mxu0 0
        %1259 = vmatprep.subr.bf16.mxu0 0
        %1260 = vmatpush1.bf16.msra.mxu0 0
        %1261 = vmatprep.subr.bf16.mxu0 0
        %1262 = vmatpush1.bf16.msra.mxu0 0
        %1263 = vmatprep.subr.bf16.mxu0 0
        %1264 = vmatpush1.bf16.msra.mxu0 0
        %1265 = vmatprep.subr.bf16.mxu0 0
        %1266 = vmatpush1.bf16.msra.mxu0 0
        %1267 = vmatprep.subr.bf16.mxu0 0
        %1268 = vmatpush1.bf16.msra.mxu0 %v1251
        %1269 = vmatprep.subr.bf16.mxu0 0
        %1270 = vmatpush2.bf16.msra.mxu0 0
        %1271 = vmatprep.subr.bf16.mxu0 0
        %1272 = vmatpush2.bf16.msra.mxu0 0
        %1273 = vmatprep.subr.bf16.mxu0 0
        %1274 = vmatpush2.bf16.msra.mxu0 0
        %1275 = vmatprep.subr.bf16.mxu0 0
        %1276 = vmatpush2.bf16.msra.mxu0 0
        %1277 = vmatprep.subr.bf16.mxu0 0
        %1278 = vmatpush2.bf16.msra.mxu0 0
        %1279 = vmatprep.subr.bf16.mxu0 0
        %1280 = vmatpush2.bf16.msra.mxu0 0
        %1281 = vmatprep.subr.bf16.mxu0 0
        %1282 = vmatpush2.bf16.msra.mxu0 0
        %1283 = vmatprep.subr.bf16.mxu0 0
        %1284 = vmatpush2.bf16.msra.mxu0 0
        %1285 = vmatprep.mubr.bf16.mxu0 0
        %1286 = vmatmul.mubr.bf16.gmra.mxu0 %v1248
        %v1287 = vpop.f32.mrf.mxu0
        %v1288 = vadd.f32 0.0, %v1287
        %v1289 = vpop.f32.mrf.mxu0
        %v1290 = vpop.f32.mrf.mxu0
        %v1291 = vpop.f32.mrf.mxu0
        %1292 = vdwg.mxu0
        %1295 = vrot.lane.b32.xlu0 %v1240, 8
        %v1296 = vpop.permute.xlu0 %1295
        %1297 = vrot.lane.b32.xlu0 %v1288, 8
        %v1298 = vpop.permute.xlu0 %1297
        %vm1301 = vcmask 130112
        %1302 = vst.msk [vmem:[#allocation3] sm:$0xff] %vm1301, %v1296
        %1303 = vst.msk [vmem:[#allocation3 + $0x8] sm:$0xff] %vm1301, %v1298
        %1304 = vrot.lane.b32.xlu0 %v845, 112
        %v1305 = vpop.permute.xlu0 %1304
        %1306 = vrot.lane.b32.xlu0 %v847, 80
        %v1307 = vpop.permute.xlu0 %1306
        %v1309 = vsel %vm852, %v1305, 0
        %v1312 = vsel %vm852, %v1307, 0
        %1314 = vmatprep.subr.bf16.mxu0 0
        %1315 = vmatpush1.bf16.xpose.msra.mxu0 0
        %1316 = vmatprep.subr.bf16.mxu0 0
        %1317 = vmatpush1.bf16.xpose.msra.mxu0 0
        %1318 = vmatprep.subr.bf16.mxu0 0
        %1319 = vmatpush1.bf16.xpose.msra.mxu0 0
        %1320 = vmatprep.subr.bf16.mxu0 0
        %1321 = vmatpush1.bf16.xpose.msra.mxu0 0
        %1322 = vmatprep.subr.bf16.mxu0 0
        %1323 = vmatpush1.bf16.xpose.msra.mxu0 0
        %1324 = vmatprep.subr.bf16.mxu0 0
        %1325 = vmatpush1.bf16.xpose.msra.mxu0 0
        %1326 = vmatprep.subr.bf16.mxu0 0
        %1327 = vmatpush1.bf16.xpose.msra.mxu0 0
        %1328 = vmatprep.subr.bf16.mxu0 0
        %1329 = vmatpush1.bf16.xpose.msra.mxu0 %v1312
        %1330 = vmatprep.subr.bf16.mxu0 0
        %1331 = vmatpush2.bf16.xpose.msra.mxu0 0
        %1332 = vmatprep.subr.bf16.mxu0 0
        %1333 = vmatpush2.bf16.xpose.msra.mxu0 0
        %1334 = vmatprep.subr.bf16.mxu0 0
        %1335 = vmatpush2.bf16.xpose.msra.mxu0 0
        %1336 = vmatprep.subr.bf16.mxu0 0
        %1337 = vmatpush2.bf16.xpose.msra.mxu0 0
        %1338 = vmatprep.subr.bf16.mxu0 0
        %1339 = vmatpush2.bf16.xpose.msra.mxu0 0
        %1340 = vmatprep.subr.bf16.mxu0 0
        %1341 = vmatpush2.bf16.xpose.msra.mxu0 0
        %1342 = vmatprep.subr.bf16.mxu0 0
        %1343 = vmatpush2.bf16.xpose.msra.mxu0 0
        %1344 = vmatprep.subr.bf16.mxu0 0
        %1345 = vmatpush2.bf16.xpose.msra.mxu0 0
        %1346 = vmatprep.mubr.bf16.mxu0 0
        %1347 = vmatmul.mubr.bf16.gmra.mxu0 %v1309
        %v1348 = vpop.f32.mrf.mxu0
        %v1349 = vadd.f32 0.0, %v1348
        %v1350 = vpop.f32.mrf.mxu0
        %v1351 = vpop.f32.mrf.mxu0
        %v1352 = vpop.f32.mrf.mxu0
        %1353 = vdwg.mxu0
        %1354 = vrot.lane.b32.xlu0 %v846, 112
        %v1355 = vpop.permute.xlu0 %1354
        %1356 = vrot.lane.b32.xlu0 %v848, 80
        %v1357 = vpop.permute.xlu0 %1356
        %v1359 = vsel %vm852, %v1355, 0
        %v1362 = vsel %vm852, %v1357, 0
        %1364 = vmatprep.subr.bf16.mxu0 0
        %1365 = vmatpush1.bf16.xpose.msra.mxu0 0
        %1366 = vmatprep.subr.bf16.mxu0 0
        %1367 = vmatpush1.bf16.xpose.msra.mxu0 0
        %1368 = vmatprep.subr.bf16.mxu0 0
        %1369 = vmatpush1.bf16.xpose.msra.mxu0 0
        %1370 = vmatprep.subr.bf16.mxu0 0
        %1371 = vmatpush1.bf16.xpose.msra.mxu0 0
        %1372 = vmatprep.subr.bf16.mxu0 0
        %1373 = vmatpush1.bf16.xpose.msra.mxu0 0
        %1374 = vmatprep.subr.bf16.mxu0 0
        %1375 = vmatpush1.bf16.xpose.msra.mxu0 0
        %1376 = vmatprep.subr.bf16.mxu0 0
        %1377 = vmatpush1.bf16.xpose.msra.mxu0 0
        %1378 = vmatprep.subr.bf16.mxu0 0
        %1379 = vmatpush1.bf16.xpose.msra.mxu0 %v1362
        %1380 = vmatprep.subr.bf16.mxu0 0
        %1381 = vmatpush2.bf16.xpose.msra.mxu0 0
        %1382 = vmatprep.subr.bf16.mxu0 0
        %1383 = vmatpush2.bf16.xpose.msra.mxu0 0
        %1384 = vmatprep.subr.bf16.mxu0 0
        %1385 = vmatpush2.bf16.xpose.msra.mxu0 0
        %1386 = vmatprep.subr.bf16.mxu0 0
        %1387 = vmatpush2.bf16.xpose.msra.mxu0 0
        %1388 = vmatprep.subr.bf16.mxu0 0
        %1389 = vmatpush2.bf16.xpose.msra.mxu0 0
        %1390 = vmatprep.subr.bf16.mxu0 0
        %1391 = vmatpush2.bf16.xpose.msra.mxu0 0
        %1392 = vmatprep.subr.bf16.mxu0 0
        %1393 = vmatpush2.bf16.xpose.msra.mxu0 0
        %1394 = vmatprep.subr.bf16.mxu0 0
        %1395 = vmatpush2.bf16.xpose.msra.mxu0 0
        %1396 = vmatprep.mubr.bf16.mxu0 0
        %1397 = vmatmul.mubr.bf16.gmra.mxu0 %v1359
        %v1398 = vpop.f32.mrf.mxu0
        %v1399 = vadd.f32 0.0, %v1398
        %v1400 = vpop.f32.mrf.mxu0
        %v1401 = vpop.f32.mrf.mxu0
        %v1402 = vpop.f32.mrf.mxu0
        %1403 = vdwg.mxu0
        %v1404 = vsel %vm852, %v1349, -inf
        %1405 = vmax.xlane.f32.xlu0 %v1404
        %v1406 = vpop.xlane.xlu0 %1405
        %v1407 = vsel %vm852, %v1399, -inf
        %1408 = vmax.xlane.f32.xlu0 %v1407
        %v1409 = vpop.xlane.xlu0 %1408
        %v1410 = vsub.f32 %v1349, %v1406
        %v1411 = vsub.f32 %v1399, %v1409
        %v1412 = vmul.f32 %v1410, 1.442695
        %v1413 = vpow.pop %v1412
        %v1414 = vmul.f32 %v1411, 1.442695
        %v1415 = vpow.pop %v1414
        %v1416 = vsel %vm852, %v1413, 0.0
        %1417 = vadd.xlane.f32.xlu0 %v1416
        %v1418 = vpop.xlane.xlu0 %1417
        %v1419 = vsel %vm852, %v1415, 0.0
        %1420 = vadd.xlane.f32.xlu0 %v1419
        %v1421 = vpop.xlane.xlu0 %1420
        %v1422 = vrcp.pop %v1418
        %v1423 = vrcp.pop %v1421
        %v1424 = vmul.f32 %v1413, %v1422
        %v1425 = vmul.f32 %v1415, %v1423
        %v1426 = vpack.c.bf16 %v1424, %v1424
        %v1427 = vpack.c.bf16 %v1425, %v1425
        %1428 = vrot.lane.b32.xlu0 %v847, 48
        %v1429 = vpop.permute.xlu0 %1428
        %v1431 = vsel %vm852, %v1426, 0
        %v1434 = vsel %vm977, %v1429, 0
        %1436 = vmatprep.subr.bf16.mxu0 0
        %1437 = vmatpush1.bf16.msra.mxu0 0
        %1438 = vmatprep.subr.bf16.mxu0 0
        %1439 = vmatpush1.bf16.msra.mxu0 0
        %1440 = vmatprep.subr.bf16.mxu0 0
        %1441 = vmatpush1.bf16.msra.mxu0 0
        %1442 = vmatprep.subr.bf16.mxu0 0
        %1443 = vmatpush1.bf16.msra.mxu0 0
        %1444 = vmatprep.subr.bf16.mxu0 0
        %1445 = vmatpush1.bf16.msra.mxu0 0
        %1446 = vmatprep.subr.bf16.mxu0 0
        %1447 = vmatpush1.bf16.msra.mxu0 0
        %1448 = vmatprep.subr.bf16.mxu0 0
        %1449 = vmatpush1.bf16.msra.mxu0 0
        %1450 = vmatprep.subr.bf16.mxu0 0
        %1451 = vmatpush1.bf16.msra.mxu0 %v1434
        %1452 = vmatprep.subr.bf16.mxu0 0
        %1453 = vmatpush2.bf16.msra.mxu0 0
        %1454 = vmatprep.subr.bf16.mxu0 0
        %1455 = vmatpush2.bf16.msra.mxu0 0
        %1456 = vmatprep.subr.bf16.mxu0 0
        %1457 = vmatpush2.bf16.msra.mxu0 0
        %1458 = vmatprep.subr.bf16.mxu0 0
        %1459 = vmatpush2.bf16.msra.mxu0 0
        %1460 = vmatprep.subr.bf16.mxu0 0
        %1461 = vmatpush2.bf16.msra.mxu0 0
        %1462 = vmatprep.subr.bf16.mxu0 0
        %1463 = vmatpush2.bf16.msra.mxu0 0
        %1464 = vmatprep.subr.bf16.mxu0 0
        %1465 = vmatpush2.bf16.msra.mxu0 0
        %1466 = vmatprep.subr.bf16.mxu0 0
        %1467 = vmatpush2.bf16.msra.mxu0 0
        %1468 = vmatprep.mubr.bf16.mxu0 0
        %1469 = vmatmul.mubr.bf16.gmra.mxu0 %v1431
        %v1470 = vpop.f32.mrf.mxu0
        %v1471 = vadd.f32 0.0, %v1470
        %v1472 = vpop.f32.mrf.mxu0
        %v1473 = vpop.f32.mrf.mxu0
        %v1474 = vpop.f32.mrf.mxu0
        %1475 = vdwg.mxu0
        %1476 = vrot.lane.b32.xlu0 %v848, 48
        %v1477 = vpop.permute.xlu0 %1476
        %v1479 = vsel %vm852, %v1427, 0
        %v1482 = vsel %vm977, %v1477, 0
        %1484 = vmatprep.subr.bf16.mxu0 0
        %1485 = vmatpush1.bf16.msra.mxu0 0
        %1486 = vmatprep.subr.bf16.mxu0 0
        %1487 = vmatpush1.bf16.msra.mxu0 0
        %1488 = vmatprep.subr.bf16.mxu0 0
        %1489 = vmatpush1.bf16.msra.mxu0 0
        %1490 = vmatprep.subr.bf16.mxu0 0
        %1491 = vmatpush1.bf16.msra.mxu0 0
        %1492 = vmatprep.subr.bf16.mxu0 0
        %1493 = vmatpush1.bf16.msra.mxu0 0
        %1494 = vmatprep.subr.bf16.mxu0 0
        %1495 = vmatpush1.bf16.msra.mxu0 0
        %1496 = vmatprep.subr.bf16.mxu0 0
        %1497 = vmatpush1.bf16.msra.mxu0 0
        %1498 = vmatprep.subr.bf16.mxu0 0
        %1499 = vmatpush1.bf16.msra.mxu0 %v1482
        %1500 = vmatprep.subr.bf16.mxu0 0
        %1501 = vmatpush2.bf16.msra.mxu0 0
        %1502 = vmatprep.subr.bf16.mxu0 0
        %1503 = vmatpush2.bf16.msra.mxu0 0
        %1504 = vmatprep.subr.bf16.mxu0 0
        %1505 = vmatpush2.bf16.msra.mxu0 0
        %1506 = vmatprep.subr.bf16.mxu0 0
        %1507 = vmatpush2.bf16.msra.mxu0 0
        %1508 = vmatprep.subr.bf16.mxu0 0
        %1509 = vmatpush2.bf16.msra.mxu0 0
        %1510 = vmatprep.subr.bf16.mxu0 0
        %1511 = vmatpush2.bf16.msra.mxu0 0
        %1512 = vmatprep.subr.bf16.mxu0 0
        %1513 = vmatpush2.bf16.msra.mxu0 0
        %1514 = vmatprep.subr.bf16.mxu0 0
        %1515 = vmatpush2.bf16.msra.mxu0 0
        %1516 = vmatprep.mubr.bf16.mxu0 0
        %1517 = vmatmul.mubr.bf16.gmra.mxu0 %v1479
        %v1518 = vpop.f32.mrf.mxu0
        %v1519 = vadd.f32 0.0, %v1518
        %v1520 = vpop.f32.mrf.mxu0
        %v1521 = vpop.f32.mrf.mxu0
        %v1522 = vpop.f32.mrf.mxu0
        %1523 = vdwg.mxu0
        %1526 = vrot.lane.b32.xlu0 %v1471, 16
        %v1527 = vpop.permute.xlu0 %1526
        %1528 = vrot.lane.b32.xlu0 %v1519, 16
        %v1529 = vpop.permute.xlu0 %1528
        %vm1532 = vcmask 195712
        %1533 = vst.msk [vmem:[#allocation3] sm:$0xff] %vm1532, %v1527
        %1534 = vst.msk [vmem:[#allocation3 + $0x8] sm:$0xff] %vm1532, %v1529
        %1535 = vrot.lane.b32.xlu0 %v845, 104
        %v1536 = vpop.permute.xlu0 %1535
        %1537 = vrot.lane.b32.xlu0 %v847, 72
        %v1538 = vpop.permute.xlu0 %1537
        %v1540 = vsel %vm852, %v1536, 0
        %v1543 = vsel %vm852, %v1538, 0
        %1545 = vmatprep.subr.bf16.mxu0 0
        %1546 = vmatpush1.bf16.xpose.msra.mxu0 0
        %1547 = vmatprep.subr.bf16.mxu0 0
        %1548 = vmatpush1.bf16.xpose.msra.mxu0 0
        %1549 = vmatprep.subr.bf16.mxu0 0
        %1550 = vmatpush1.bf16.xpose.msra.mxu0 0
        %1551 = vmatprep.subr.bf16.mxu0 0
        %1552 = vmatpush1.bf16.xpose.msra.mxu0 0
        %1553 = vmatprep.subr.bf16.mxu0 0
        %1554 = vmatpush1.bf16.xpose.msra.mxu0 0
        %1555 = vmatprep.subr.bf16.mxu0 0
        %1556 = vmatpush1.bf16.xpose.msra.mxu0 0
        %1557 = vmatprep.subr.bf16.mxu0 0
        %1558 = vmatpush1.bf16.xpose.msra.mxu0 0
        %1559 = vmatprep.subr.bf16.mxu0 0
        %1560 = vmatpush1.bf16.xpose.msra.mxu0 %v1543
        %1561 = vmatprep.subr.bf16.mxu0 0
        %1562 = vmatpush2.bf16.xpose.msra.mxu0 0
        %1563 = vmatprep.subr.bf16.mxu0 0
        %1564 = vmatpush2.bf16.xpose.msra.mxu0 0
        %1565 = vmatprep.subr.bf16.mxu0 0
        %1566 = vmatpush2.bf16.xpose.msra.mxu0 0
        %1567 = vmatprep.subr.bf16.mxu0 0
        %1568 = vmatpush2.bf16.xpose.msra.mxu0 0
        %1569 = vmatprep.subr.bf16.mxu0 0
        %1570 = vmatpush2.bf16.xpose.msra.mxu0 0
        %1571 = vmatprep.subr.bf16.mxu0 0
        %1572 = vmatpush2.bf16.xpose.msra.mxu0 0
        %1573 = vmatprep.subr.bf16.mxu0 0
        %1574 = vmatpush2.bf16.xpose.msra.mxu0 0
        %1575 = vmatprep.subr.bf16.mxu0 0
        %1576 = vmatpush2.bf16.xpose.msra.mxu0 0
        %1577 = vmatprep.mubr.bf16.mxu0 0
        %1578 = vmatmul.mubr.bf16.gmra.mxu0 %v1540
        %v1579 = vpop.f32.mrf.mxu0
        %v1580 = vadd.f32 0.0, %v1579
        %v1581 = vpop.f32.mrf.mxu0
        %v1582 = vpop.f32.mrf.mxu0
        %v1583 = vpop.f32.mrf.mxu0
        %1584 = vdwg.mxu0
        %1585 = vrot.lane.b32.xlu0 %v846, 104
        %v1586 = vpop.permute.xlu0 %1585
        %1587 = vrot.lane.b32.xlu0 %v848, 72
        %v1588 = vpop.permute.xlu0 %1587
        %v1590 = vsel %vm852, %v1586, 0
        %v1593 = vsel %vm852, %v1588, 0
        %1595 = vmatprep.subr.bf16.mxu0 0
        %1596 = vmatpush1.bf16.xpose.msra.mxu0 0
        %1597 = vmatprep.subr.bf16.mxu0 0
        %1598 = vmatpush1.bf16.xpose.msra.mxu0 0
        %1599 = vmatprep.subr.bf16.mxu0 0
        %1600 = vmatpush1.bf16.xpose.msra.mxu0 0
        %1601 = vmatprep.subr.bf16.mxu0 0
        %1602 = vmatpush1.bf16.xpose.msra.mxu0 0
        %1603 = vmatprep.subr.bf16.mxu0 0
        %1604 = vmatpush1.bf16.xpose.msra.mxu0 0
        %1605 = vmatprep.subr.bf16.mxu0 0
        %1606 = vmatpush1.bf16.xpose.msra.mxu0 0
        %1607 = vmatprep.subr.bf16.mxu0 0
        %1608 = vmatpush1.bf16.xpose.msra.mxu0 0
        %1609 = vmatprep.subr.bf16.mxu0 0
        %1610 = vmatpush1.bf16.xpose.msra.mxu0 %v1593
        %1611 = vmatprep.subr.bf16.mxu0 0
        %1612 = vmatpush2.bf16.xpose.msra.mxu0 0
        %1613 = vmatprep.subr.bf16.mxu0 0
        %1614 = vmatpush2.bf16.xpose.msra.mxu0 0
        %1615 = vmatprep.subr.bf16.mxu0 0
        %1616 = vmatpush2.bf16.xpose.msra.mxu0 0
        %1617 = vmatprep.subr.bf16.mxu0 0
        %1618 = vmatpush2.bf16.xpose.msra.mxu0 0
        %1619 = vmatprep.subr.bf16.mxu0 0
        %1620 = vmatpush2.bf16.xpose.msra.mxu0 0
        %1621 = vmatprep.subr.bf16.mxu0 0
        %1622 = vmatpush2.bf16.xpose.msra.mxu0 0
        %1623 = vmatprep.subr.bf16.mxu0 0
        %1624 = vmatpush2.bf16.xpose.msra.mxu0 0
        %1625 = vmatprep.subr.bf16.mxu0 0
        %1626 = vmatpush2.bf16.xpose.msra.mxu0 0
        %1627 = vmatprep.mubr.bf16.mxu0 0
        %1628 = vmatmul.mubr.bf16.gmra.mxu0 %v1590
        %v1629 = vpop.f32.mrf.mxu0
        %v1630 = vadd.f32 0.0, %v1629
        %v1631 = vpop.f32.mrf.mxu0
        %v1632 = vpop.f32.mrf.mxu0
        %v1633 = vpop.f32.mrf.mxu0
        %1634 = vdwg.mxu0
        %v1635 = vsel %vm852, %v1580, -inf
        %1636 = vmax.xlane.f32.xlu0 %v1635
        %v1637 = vpop.xlane.xlu0 %1636
        %v1638 = vsel %vm852, %v1630, -inf
        %1639 = vmax.xlane.f32.xlu0 %v1638
        %v1640 = vpop.xlane.xlu0 %1639
        %v1641 = vsub.f32 %v1580, %v1637
        %v1642 = vsub.f32 %v1630, %v1640
        %v1643 = vmul.f32 %v1641, 1.442695
        %v1644 = vpow.pop %v1643
        %v1645 = vmul.f32 %v1642, 1.442695
        %v1646 = vpow.pop %v1645
        %v1647 = vsel %vm852, %v1644, 0.0
        %1648 = vadd.xlane.f32.xlu0 %v1647
        %v1649 = vpop.xlane.xlu0 %1648
        %v1650 = vsel %vm852, %v1646, 0.0
        %1651 = vadd.xlane.f32.xlu0 %v1650
        %v1652 = vpop.xlane.xlu0 %1651
        %v1653 = vrcp.pop %v1649
        %v1654 = vrcp.pop %v1652
        %v1655 = vmul.f32 %v1644, %v1653
        %v1656 = vmul.f32 %v1646, %v1654
        %v1657 = vpack.c.bf16 %v1655, %v1655
        %v1658 = vpack.c.bf16 %v1656, %v1656
        %1659 = vrot.lane.b32.xlu0 %v847, 40
        %v1660 = vpop.permute.xlu0 %1659
        %v1662 = vsel %vm852, %v1657, 0
        %v1665 = vsel %vm977, %v1660, 0
        %1667 = vmatprep.subr.bf16.mxu0 0
        %1668 = vmatpush1.bf16.msra.mxu0 0
        %1669 = vmatprep.subr.bf16.mxu0 0
        %1670 = vmatpush1.bf16.msra.mxu0 0
        %1671 = vmatprep.subr.bf16.mxu0 0
        %1672 = vmatpush1.bf16.msra.mxu0 0
        %1673 = vmatprep.subr.bf16.mxu0 0
        %1674 = vmatpush1.bf16.msra.mxu0 0
        %1675 = vmatprep.subr.bf16.mxu0 0
        %1676 = vmatpush1.bf16.msra.mxu0 0
        %1677 = vmatprep.subr.bf16.mxu0 0
        %1678 = vmatpush1.bf16.msra.mxu0 0
        %1679 = vmatprep.subr.bf16.mxu0 0
        %1680 = vmatpush1.bf16.msra.mxu0 0
        %1681 = vmatprep.subr.bf16.mxu0 0
        %1682 = vmatpush1.bf16.msra.mxu0 %v1665
        %1683 = vmatprep.subr.bf16.mxu0 0
        %1684 = vmatpush2.bf16.msra.mxu0 0
        %1685 = vmatprep.subr.bf16.mxu0 0
        %1686 = vmatpush2.bf16.msra.mxu0 0
        %1687 = vmatprep.subr.bf16.mxu0 0
        %1688 = vmatpush2.bf16.msra.mxu0 0
        %1689 = vmatprep.subr.bf16.mxu0 0
        %1690 = vmatpush2.bf16.msra.mxu0 0
        %1691 = vmatprep.subr.bf16.mxu0 0
        %1692 = vmatpush2.bf16.msra.mxu0 0
        %1693 = vmatprep.subr.bf16.mxu0 0
        %1694 = vmatpush2.bf16.msra.mxu0 0
        %1695 = vmatprep.subr.bf16.mxu0 0
        %1696 = vmatpush2.bf16.msra.mxu0 0
        %1697 = vmatprep.subr.bf16.mxu0 0
        %1698 = vmatpush2.bf16.msra.mxu0 0
        %1699 = vmatprep.mubr.bf16.mxu0 0
        %1700 = vmatmul.mubr.bf16.gmra.mxu0 %v1662
        %v1701 = vpop.f32.mrf.mxu0
        %v1702 = vadd.f32 0.0, %v1701
        %v1703 = vpop.f32.mrf.mxu0
        %v1704 = vpop.f32.mrf.mxu0
        %v1705 = vpop.f32.mrf.mxu0
        %1706 = vdwg.mxu0
        %1707 = vrot.lane.b32.xlu0 %v848, 40
        %v1708 = vpop.permute.xlu0 %1707
        %v1710 = vsel %vm852, %v1658, 0
        %v1713 = vsel %vm977, %v1708, 0
        %1715 = vmatprep.subr.bf16.mxu0 0
        %1716 = vmatpush1.bf16.msra.mxu0 0
        %1717 = vmatprep.subr.bf16.mxu0 0
        %1718 = vmatpush1.bf16.msra.mxu0 0
        %1719 = vmatprep.subr.bf16.mxu0 0
        %1720 = vmatpush1.bf16.msra.mxu0 0
        %1721 = vmatprep.subr.bf16.mxu0 0
        %1722 = vmatpush1.bf16.msra.mxu0 0
        %1723 = vmatprep.subr.bf16.mxu0 0
        %1724 = vmatpush1.bf16.msra.mxu0 0
        %1725 = vmatprep.subr.bf16.mxu0 0
        %1726 = vmatpush1.bf16.msra.mxu0 0
        %1727 = vmatprep.subr.bf16.mxu0 0
        %1728 = vmatpush1.bf16.msra.mxu0 0
        %1729 = vmatprep.subr.bf16.mxu0 0
        %1730 = vmatpush1.bf16.msra.mxu0 %v1713
        %1731 = vmatprep.subr.bf16.mxu0 0
        %1732 = vmatpush2.bf16.msra.mxu0 0
        %1733 = vmatprep.subr.bf16.mxu0 0
        %1734 = vmatpush2.bf16.msra.mxu0 0
        %1735 = vmatprep.subr.bf16.mxu0 0
        %1736 = vmatpush2.bf16.msra.mxu0 0
        %1737 = vmatprep.subr.bf16.mxu0 0
        %1738 = vmatpush2.bf16.msra.mxu0 0
        %1739 = vmatprep.subr.bf16.mxu0 0
        %1740 = vmatpush2.bf16.msra.mxu0 0
        %1741 = vmatprep.subr.bf16.mxu0 0
        %1742 = vmatpush2.bf16.msra.mxu0 0
        %1743 = vmatprep.subr.bf16.mxu0 0
        %1744 = vmatpush2.bf16.msra.mxu0 0
        %1745 = vmatprep.subr.bf16.mxu0 0
        %1746 = vmatpush2.bf16.msra.mxu0 0
        %1747 = vmatprep.mubr.bf16.mxu0 0
        %1748 = vmatmul.mubr.bf16.gmra.mxu0 %v1710
        %v1749 = vpop.f32.mrf.mxu0
        %v1750 = vadd.f32 0.0, %v1749
        %v1751 = vpop.f32.mrf.mxu0
        %v1752 = vpop.f32.mrf.mxu0
        %v1753 = vpop.f32.mrf.mxu0
        %1754 = vdwg.mxu0
        %1757 = vrot.lane.b32.xlu0 %v1702, 24
        %v1758 = vpop.permute.xlu0 %1757
        %1759 = vrot.lane.b32.xlu0 %v1750, 24
        %v1760 = vpop.permute.xlu0 %1759
        %vm1763 = vcmask 261312
        %1764 = vst.msk [vmem:[#allocation3] sm:$0xff] %vm1763, %v1758
        %1765 = vst.msk [vmem:[#allocation3 + $0x8] sm:$0xff] %vm1763, %v1760
        %v1766 = vld [vmem:[#allocation3] sm:$0xff]
        %v1767 = vld [vmem:[#allocation3 + $0x8] sm:$0xff]
        %v1768 = vpack.c.bf16 %v1767, %v1766
        %v1769 = vld [vmem:[%s682] sm:$0xf]
        %v1770 = vld [vmem:[%s682 + $0x4] sm:$0xf]
        %v1771 = vld [vmem:[%s682 + $0x8] sm:$0xf]
        %v1772 = vld [vmem:[%s682 + $0xc] sm:$0xf]
        %v1773 = vld [vmem:[%s685] sm:$0x1]
        %v1775 = vlaneseq
        %v1776 = vshrl.u32 %v1775, 7
        %v1777 = vsub.s32 0, %v1776
        %v1778 = vrot.slane %v1773, %v1777
        %v1784 = vunpack.c.l.b16 %v1769
        %v1785 = vunpack.c.l.b16 %v1770
        %v1786 = vunpack.c.l.b16 %v1771
        %v1787 = vunpack.c.l.b16 %v1772
        %v1788 = vpack.c.b16 %v1785, %v1784
        %v1789 = vpack.c.b16 %v1787, %v1786
        %v1793 = vsel %vm731, %v1768, 0
        %1795 = vmatprep.subr.bf16.mxu0 0
        %1796 = vmatpush1.bf16.msra.mxu0 0
        %1797 = vmatprep.subr.bf16.mxu0 0
        %1798 = vmatpush1.bf16.msra.mxu0 0
        %1799 = vmatprep.subr.bf16.mxu0 0
        %1800 = vmatpush1.bf16.msra.mxu0 0
        %1801 = vmatprep.subr.bf16.mxu0 0
        %1802 = vmatpush1.bf16.msra.mxu0 0
        %1803 = vmatprep.subr.bf16.mxu0 0
        %1804 = vmatpush1.bf16.msra.mxu0 0
        %1805 = vmatprep.subr.bf16.mxu0 0
        %1806 = vmatpush1.bf16.msra.mxu0 0
        %1807 = vmatprep.subr.bf16.mxu0 0
        %1808 = vmatpush1.bf16.msra.mxu0 %v1789
        %1809 = vmatprep.subr.bf16.mxu0 0
        %1810 = vmatpush1.bf16.msra.mxu0 %v1788
        %1811 = vmatprep.subr.bf16.mxu0 0
        %1812 = vmatpush2.bf16.msra.mxu0 0
        %1813 = vmatprep.subr.bf16.mxu0 0
        %1814 = vmatpush2.bf16.msra.mxu0 0
        %1815 = vmatprep.subr.bf16.mxu0 0
        %1816 = vmatpush2.bf16.msra.mxu0 0
        %1817 = vmatprep.subr.bf16.mxu0 0
        %1818 = vmatpush2.bf16.msra.mxu0 0
        %1819 = vmatprep.subr.bf16.mxu0 0
        %1820 = vmatpush2.bf16.msra.mxu0 0
        %1821 = vmatprep.subr.bf16.mxu0 0
        %1822 = vmatpush2.bf16.msra.mxu0 0
        %1823 = vmatprep.subr.bf16.mxu0 0
        %1824 = vmatpush2.bf16.msra.mxu0 0
        %1825 = vmatprep.subr.bf16.mxu0 0
        %1826 = vmatpush2.bf16.msra.mxu0 0
        %1827 = vmatprep.mubr.bf16.mxu0 0
        %1828 = vmatmul.mubr.bf16.gmra.mxu0 %v1793
        %v1829 = vpop.f32.mrf.mxu0
        %v1830 = vadd.f32 %v1778, %v1829
        %v1831 = vpop.f32.mrf.mxu0
        %v1832 = vpop.f32.mrf.mxu0
        %v1833 = vadd.f32 %v1778, %v1832
        %v1834 = vpop.f32.mrf.mxu0
        %1835 = vdwg.mxu0
        %v1836 = vadd.f32 %v1830, %v727
        %v1837 = vadd.f32 %v1833, %v728
        %v1838 = vld [vmem:[%s688] sm:$0x1]
        %v1839 = vld [vmem:[%s691] sm:$0x1]
        %v1840 = vsel %vm731, %v1836, 0.0
        %1841 = vadd.xlane.f32.xlu0 %v1840
        %v1842 = vpop.xlane.xlu0 %1841
        %v1843 = vsel %vm731, %v1837, 0.0
        %1844 = vadd.xlane.f32.xlu0 %v1843
        %v1845 = vpop.xlane.xlu0 %1844
        %v1846 = vmul.f32 %v1842, %v738
        %v1847 = vmul.f32 %v1845, %v738
        %v1848 = vsub.f32 %v1836, %v1846
        %v1849 = vsub.f32 %v1837, %v1847
        %v1850 = vmul.f32 %v1848, %v1848
        %v1851 = vmul.f32 %v1849, %v1849
        %v1852 = vsel %vm731, %v1850, 0.0
        %1853 = vadd.xlane.f32.xlu0 %v1852
        %v1854 = vpop.xlane.xlu0 %1853
        %v1855 = vsel %vm731, %v1851, 0.0
        %1856 = vadd.xlane.f32.xlu0 %v1855
        %v1857 = vpop.xlane.xlu0 %1856
        %v1858 = vmul.f32 %v1854, %v738
        %v1859 = vmul.f32 %v1857, %v738
        %v1860 = vadd.f32 %v1858, 1e-05
        %v1861 = vadd.f32 %v1859, 1e-05
        %v1862 = vrsqrt.pop %v1860
        %v1863 = vrsqrt.pop %v1861
        %v1864 = vmul.f32 %v1848, %v1862
        %v1865 = vmul.f32 %v1849, %v1863
        %v1867 = vlaneseq
        %v1868 = vshrl.u32 %v1867, 7
        %v1869 = vsub.s32 0, %v1868
        %v1870 = vrot.slane %v1838, %v1869
        %v1872 = vmul.f32 %v1864, %v1870
        %v1873 = vmul.f32 %v1865, %v1870
        %v1875 = vlaneseq
        %v1876 = vshrl.u32 %v1875, 7
        %v1877 = vsub.s32 0, %v1876
        %v1878 = vrot.slane %v1839, %v1877
        %v1880 = vadd.f32 %v1872, %v1878
        %v1881 = vadd.f32 %v1873, %v1878
        %v1882 = vpack.c.bf16 %v1881, %v1880
        %v1883 = vld [vmem:[%s696] sm:$0xf]
        %v1884 = vld [vmem:[%s696 + $0x4] sm:$0xf]
        %v1885 = vld [vmem:[%s696 + $0x8] sm:$0xf]
        %v1886 = vld [vmem:[%s696 + $0xc] sm:$0xf]
        %v1887 = vld [vmem:[%s699] sm:$0x1]
        %v1889 = vlaneseq
        %v1890 = vshrl.u32 %v1889, 7
        %v1891 = vsub.s32 0, %v1890
        %v1892 = vrot.slane %v1887, %v1891
        %v1898 = vunpack.c.l.b16 %v1883
        %v1899 = vunpack.c.l.b16 %v1884
        %v1900 = vunpack.c.l.b16 %v1885
        %v1901 = vunpack.c.l.b16 %v1886
        %v1902 = vpack.c.b16 %v1899, %v1898
        %v1903 = vpack.c.b16 %v1901, %v1900
        %v1907 = vsel %vm731, %v1882, 0
        %1909 = vmatprep.subr.bf16.mxu0 0
        %1910 = vmatpush1.bf16.msra.mxu0 0
        %1911 = vmatprep.subr.bf16.mxu0 0
        %1912 = vmatpush1.bf16.msra.mxu0 0
        %1913 = vmatprep.subr.bf16.mxu0 0
        %1914 = vmatpush1.bf16.msra.mxu0 0
        %1915 = vmatprep.subr.bf16.mxu0 0
        %1916 = vmatpush1.bf16.msra.mxu0 0
        %1917 = vmatprep.subr.bf16.mxu0 0
        %1918 = vmatpush1.bf16.msra.mxu0 0
        %1919 = vmatprep.subr.bf16.mxu0 0
        %1920 = vmatpush1.bf16.msra.mxu0 0
        %1921 = vmatprep.subr.bf16.mxu0 0
        %1922 = vmatpush1.bf16.msra.mxu0 %v1903
        %1923 = vmatprep.subr.bf16.mxu0 0
        %1924 = vmatpush1.bf16.msra.mxu0 %v1902
        %1925 = vmatprep.subr.bf16.mxu0 0
        %1926 = vmatpush2.bf16.msra.mxu0 0
        %1927 = vmatprep.subr.bf16.mxu0 0
        %1928 = vmatpush2.bf16.msra.mxu0 0
        %1929 = vmatprep.subr.bf16.mxu0 0
        %1930 = vmatpush2.bf16.msra.mxu0 0
        %1931 = vmatprep.subr.bf16.mxu0 0
        %1932 = vmatpush2.bf16.msra.mxu0 0
        %1933 = vmatprep.subr.bf16.mxu0 0
        %1934 = vmatpush2.bf16.msra.mxu0 0
        %1935 = vmatprep.subr.bf16.mxu0 0
        %1936 = vmatpush2.bf16.msra.mxu0 0
        %1937 = vmatprep.subr.bf16.mxu0 0
        %1938 = vmatpush2.bf16.msra.mxu0 0
        %1939 = vmatprep.subr.bf16.mxu0 0
        %1940 = vmatpush2.bf16.msra.mxu0 0
        %1941 = vmatprep.mubr.bf16.mxu0 0
        %1942 = vmatmul.mubr.bf16.gmra.mxu0 %v1907
        %v1943 = vpop.f32.mrf.mxu0
        %v1944 = vadd.f32 %v1892, %v1943
        %v1945 = vpop.f32.mrf.mxu0
        %v1946 = vpop.f32.mrf.mxu0
        %v1947 = vadd.f32 %v1892, %v1946
        %v1948 = vpop.f32.mrf.mxu0
        %1949 = vdwg.mxu0
        %v1950 = vmax.f32 %v1944, 0.0
        %v1951 = vmax.f32 %v1947, 0.0
        %v1952 = vpack.c.bf16 %v1951, %v1950
        %v1953 = vld [vmem:[%s704] sm:$0xf]
        %v1954 = vld [vmem:[%s704 + $0x4] sm:$0xf]
        %v1955 = vld [vmem:[%s704 + $0x8] sm:$0xf]
        %v1956 = vld [vmem:[%s704 + $0xc] sm:$0xf]
        %v1957 = vld [vmem:[%s704 + $0x10] sm:$0xf]
        %v1958 = vld [vmem:[%s704 + $0x14] sm:$0xf]
        %v1959 = vld [vmem:[%s704 + $0x18] sm:$0xf]
        %v1960 = vld [vmem:[%s704 + $0x1c] sm:$0xf]
        %v1961 = vld [vmem:[%s707] sm:$0x1]
        %v1963 = vlaneseq
        %v1964 = vshrl.u32 %v1963, 7
        %v1965 = vsub.s32 0, %v1964
        %v1966 = vrot.slane %v1961, %v1965
        %v1976 = vunpack.c.l.b16 %v1953
        %v1977 = vunpack.c.l.b16 %v1954
        %v1978 = vunpack.c.l.b16 %v1955
        %v1979 = vunpack.c.l.b16 %v1956
        %v1980 = vunpack.c.l.b16 %v1957
        %v1981 = vunpack.c.l.b16 %v1958
        %v1982 = vunpack.c.l.b16 %v1959
        %v1983 = vunpack.c.l.b16 %v1960
        %v1984 = vpack.c.b16 %v1977, %v1976
        %v1985 = vpack.c.b16 %v1979, %v1978
        %v1986 = vpack.c.b16 %v1981, %v1980
        %v1987 = vpack.c.b16 %v1983, %v1982
        %vm1992 = vcmask 523264
        %v1994 = vsel %vm1992, %v1952, 0
        %1996 = vmatprep.subr.bf16.mxu0 0
        %1997 = vmatpush1.bf16.msra.mxu0 0
        %1998 = vmatprep.subr.bf16.mxu0 0
        %1999 = vmatpush1.bf16.msra.mxu0 0
        %2000 = vmatprep.subr.bf16.mxu0 0
        %2001 = vmatpush1.bf16.msra.mxu0 0
        %2002 = vmatprep.subr.bf16.mxu0 0
        %2003 = vmatpush1.bf16.msra.mxu0 0
        %2004 = vmatprep.subr.bf16.mxu0 0
        %2005 = vmatpush1.bf16.msra.mxu0 %v1987
        %2006 = vmatprep.subr.bf16.mxu0 0
        %2007 = vmatpush1.bf16.msra.mxu0 %v1986
        %2008 = vmatprep.subr.bf16.mxu0 0
        %2009 = vmatpush1.bf16.msra.mxu0 %v1985
        %2010 = vmatprep.subr.bf16.mxu0 0
        %2011 = vmatpush1.bf16.msra.mxu0 %v1984
        %2012 = vmatprep.subr.bf16.mxu0 0
        %2013 = vmatpush2.bf16.msra.mxu0 0
        %2014 = vmatprep.subr.bf16.mxu0 0
        %2015 = vmatpush2.bf16.msra.mxu0 0
        %2016 = vmatprep.subr.bf16.mxu0 0
        %2017 = vmatpush2.bf16.msra.mxu0 0
        %2018 = vmatprep.subr.bf16.mxu0 0
        %2019 = vmatpush2.bf16.msra.mxu0 0
        %2020 = vmatprep.subr.bf16.mxu0 0
        %2021 = vmatpush2.bf16.msra.mxu0 0
        %2022 = vmatprep.subr.bf16.mxu0 0
        %2023 = vmatpush2.bf16.msra.mxu0 0
        %2024 = vmatprep.subr.bf16.mxu0 0
        %2025 = vmatpush2.bf16.msra.mxu0 0
        %2026 = vmatprep.subr.bf16.mxu0 0
        %2027 = vmatpush2.bf16.msra.mxu0 0
        %2028 = vmatprep.mubr.bf16.mxu0 0
        %2029 = vmatmul.mubr.bf16.gmra.mxu0 %v1994
        %v2030 = vpop.f32.mrf.mxu0
        %v2031 = vadd.f32 %v1966, %v2030
        %v2032 = vpop.f32.mrf.mxu0
        %v2033 = vpop.f32.mrf.mxu0
        %v2034 = vadd.f32 %v1966, %v2033
        %v2035 = vpop.f32.mrf.mxu0
        %2036 = vdwg.mxu0
        %v2037 = vadd.f32 %v1836, %v2031
        %v2038 = vadd.f32 %v1837, %v2034
        %2039 = vst.msk [vmem:[#allocation2] sm:$0xff] %vm731, %v2037
        %2040 = vst.msk [vmem:[#allocation2 + $0x8] sm:$0xff] %vm731, %v2038
        %p2041 = scmp.eq.s32.totalorder %s30, 1
        // Predicated region
        $region97: #{tpu_custom_call.1} parent=83 // pred_check
          %p2042 = pneg %p2041
        $region98: #{tpu_custom_call.1} parent=83 // pred_check_branch
          %2044 = sbr.rel (%p2042) target = $region100
        $region99: #{tpu_custom_call.1} parent=83 // pred_region
          %v2045 = vld [vmem:[%s14] sm:$0x1]
          %v2046 = vld [vmem:[%s15] sm:$0x1]
          %v2047 = vsel %vm731, %v2037, 0.0
          %2048 = vadd.xlane.f32.xlu0 %v2047
          %v2049 = vpop.xlane.xlu0 %2048
          %v2050 = vsel %vm731, %v2038, 0.0
          %2051 = vadd.xlane.f32.xlu0 %v2050
          %v2052 = vpop.xlane.xlu0 %2051
          %v2053 = vmul.f32 %v2049, %v738
          %v2054 = vmul.f32 %v2052, %v738
          %v2055 = vsub.f32 %v2037, %v2053
          %v2056 = vsub.f32 %v2038, %v2054
          %v2057 = vmul.f32 %v2055, %v2055
          %v2058 = vmul.f32 %v2056, %v2056
          %v2059 = vsel %vm731, %v2057, 0.0
          %2060 = vadd.xlane.f32.xlu0 %v2059
          %v2061 = vpop.xlane.xlu0 %2060
          %v2062 = vsel %vm731, %v2058, 0.0
          %2063 = vadd.xlane.f32.xlu0 %v2062
          %v2064 = vpop.xlane.xlu0 %2063
          %v2065 = vmul.f32 %v2061, %v738
          %v2066 = vmul.f32 %v2064, %v738
          %v2067 = vadd.f32 %v2065, 1e-05
          %v2068 = vadd.f32 %v2066, 1e-05
          %v2069 = vrsqrt.pop %v2067
          %v2070 = vrsqrt.pop %v2068
          %v2071 = vmul.f32 %v2055, %v2069
          %v2072 = vmul.f32 %v2056, %v2070
          %v2074 = vlaneseq
          %v2075 = vshrl.u32 %v2074, 7
          %v2076 = vsub.s32 0, %v2075
          %v2077 = vrot.slane %v2045, %v2076
          %v2079 = vmul.f32 %v2071, %v2077
          %v2080 = vmul.f32 %v2072, %v2077
          %v2082 = vlaneseq
          %v2083 = vshrl.u32 %v2082, 7
          %v2084 = vsub.s32 0, %v2083
          %v2085 = vrot.slane %v2046, %v2084
          %v2087 = vadd.f32 %v2079, %v2085
          %v2088 = vadd.f32 %v2080, %v2085
          %2089 = vst.msk [vmem:[#allocation9] sm:$0xff] %vm731, %v2087
          %2090 = vst.msk [vmem:[#allocation9 + $0x8] sm:$0xff] %vm731, %v2088
        $region100: #{tpu_custom_call.1} parent=83 // pred_fallthru
          _
        // Predicated region
        $region101: #{tpu_custom_call.1} parent=83 // pred_check
          %p2091 = pneg %p439
        $region102: #{tpu_custom_call.1} parent=83 // pred_check_branch
          %2093 = sbr.rel (%p2091) target = $region104
        $region103: #{tpu_custom_call.1} parent=83 // pred_region
          %s2095 = ssub.s32 256, 256
          %2096 = vsyncadd [#allocation6], %s2095
          %s2097 = sshll.u32 [#allocation9], 4
          %s2098 = int_to_ptr.vmem [resolvable:$true] %s2097
          %2103 = dma.vmem_to_hbm [thread:$0]  %s2098, 256, %s16, [#allocation6], 128, 128, 8
        $region104: #{tpu_custom_call.1} parent=83 // pred_fallthru
          _
        // Predicated region
        $region105: #{tpu_custom_call.1} parent=83 // pred_check
          %p2104 = pneg %p439
        $region106: #{tpu_custom_call.1} parent=83 // pred_check_branch
          %2106 = sbr.rel (%p2104) target = $region108
        $region107: #{tpu_custom_call.1} parent=83 // pred_region
          %2107 = dma.done [#allocation6], 256
        $region108: #{tpu_custom_call.1} parent=83 // pred_fallthru
          _
      $region84: #{tpu_custom_call.1} parent=5 // pred_fallthru
        _
      %p2108 = scmp.le.s32.totalorder 2, %s25
      // Predicated region
      $region109: #{tpu_custom_call.1} parent=5 // pred_check
        %p2109 = pneg %p2108
      $region110: #{tpu_custom_call.1} parent=5 // pred_check_branch
        %2111 = sbr.rel (%p2109) target = $region112
      $region111: #{tpu_custom_call.1} parent=5 // pred_region
        %s2112 = ssub.s32 %s25, 2
      $region112: #{tpu_custom_call.1} parent=5 // pred_fallthru
        _
    $region6: #{tpu_custom_call.1} parent=1 // loop_footer
      %s29 = sadd.s32 1, %s25
    $region7: #{tpu_custom_call.1} parent=1 // loop_footer_branch
      %24 = sbr.rel target = $region3
    $region8: #{tpu_custom_call.1} parent=1 // loop_exit
      _
    %2113 = vsyncpa [#allocation5], 1
    %s2114 = scalar_lea.sflag [#allocation5], 1
    %2115 = vsyncpa %s2114, 1
    %2116 = vsyncpa [#allocation8], 1
    %2117 = vsyncpa [#allocation6], 1
    %s2118 = scalar_lea.sflag [#allocation6], 1
    %2119 = vsyncpa %s2118, 1

</llo_original>
